<compile_context>
chip_gen: v6e
topology: v6e:2x2x1
jax: 0.10.0
libtpu: 0.0.40
codegen_flags: <defaults>
</compile_context>

<pallas_src>
import jax
import jax.numpy as jnp
from jax.experimental import pallas as pl
from jax.experimental.pallas import tpu as pltpu

IN_FEATURES = 28 * 28          # 784
HIDDEN = 512
OUT_FEATURES = 10
OUT_PADDED = 128               # lane-dense output width (sliced back to 10)
MAX_TB = 1024                  # cap on rows per batch tile
VMEM_LIMIT_BYTES = 48 * 1024 * 1024


def _cdiv(a, b):
    return (a + b - 1) // b


def _round_up(n, m):
    return _cdiv(n, m) * m


def mlp_kernel(x_ref, w1_ref, b1_ref, w2_ref, b2_ref, w3_ref, b3_ref, o_ref):
    # x arrives as f32 straight from HBM (no extra wrapper pass); the bf16 cast
    # is VPU filler hidden under MXU slack.
    x = x_ref[...].astype(jnp.bfloat16)

    # Layer 1: Linear(784->512) + ReLU (bf16 MXU inputs, f32 accumulate).
    h = jnp.dot(x, w1_ref[...], preferred_element_type=jnp.float32)
    h = jnp.maximum(h + b1_ref[...], 0.0)

    # Layer 2: Linear(512->512) + ReLU.  (Dropout(p=0.0) is identity.)
    h = jnp.dot(h.astype(jnp.bfloat16), w2_ref[...],
                preferred_element_type=jnp.float32)
    h = jnp.maximum(h + b2_ref[...], 0.0)

    # Output layer: Linear(512->10) computed into a lane-dense 128-wide tile
    # (columns 10..127 of w3/b3 are exact zeros).
    o = jnp.dot(h.astype(jnp.bfloat16), w3_ref[...],
                preferred_element_type=jnp.float32)
    o_ref[...] = (o + b3_ref[...]).astype(o_ref.dtype)


def fmnist_mlp_forward(x_nchw, params):
    """x_nchw: (B, 1, 28, 28) float -> logits (B, 10) float32."""
    w1, b1, w2, b2, w3, b3 = params
    B = x_nchw.shape[0]

    # nn.Flatten (row-major over C,H,W): metadata-only reshape; no pad, no cast
    # pass over the activations in the wrapper.
    x = x_nchw.reshape(B, IN_FEATURES).astype(jnp.float32)

    # Balanced batch-tile selection:
    #   * TB <= MAX_TB (bounds VMEM),
    #   * >= 2 grid steps when there is enough work (v7x megacore: the
    #     "parallel" batch axis is split across both TensorCores),
    #   * TB ~ cdiv(B, n_steps) so a ragged tail costs < 1 tile.
    B8 = _round_up(B, 8)
    n_steps = _cdiv(B8, MAX_TB)
    if B8 >= 16:
        n_steps = max(n_steps, 2)
    TB = _round_up(_cdiv(B8, n_steps), 8)
    grid = (_cdiv(B, TB),)

    # Weight prep (tiny, one-time): bf16 MXU inputs; zero-pad layer-3 lanes.
    w1p = w1.astype(jnp.bfloat16)                                   # (784, 512)
    w2p = w2.astype(jnp.bfloat16)                                   # (512, 512)
    w3p = jnp.pad(w3, ((0, 0), (0, OUT_PADDED - OUT_FEATURES))
                  ).astype(jnp.bfloat16)                            # (512, 128)
    b1p = b1.reshape(1, HIDDEN).astype(jnp.float32)
    b2p = b2.reshape(1, HIDDEN).astype(jnp.float32)
    b3p = jnp.pad(b3.reshape(1, OUT_FEATURES),
                  ((0, 0), (0, OUT_PADDED - OUT_FEATURES))).astype(jnp.float32)

    resident = lambda i: (0, 0)      # weights/biases stay in VMEM across grid

    out = pl.pallas_call(
        mlp_kernel,
        out_shape=jax.ShapeDtypeStruct((B, OUT_PADDED), jnp.float32),
        grid=grid,
        in_specs=[
            # x: tiled over batch; last block dim == full array dim (784).
            pl.BlockSpec((TB, IN_FEATURES), lambda i: (i, 0)),
            pl.BlockSpec((IN_FEATURES, HIDDEN), resident),          # w1
            pl.BlockSpec((1, HIDDEN), resident),                    # b1
            pl.BlockSpec((HIDDEN, HIDDEN), resident),               # w2
            pl.BlockSpec((1, HIDDEN), resident),                    # b2
            pl.BlockSpec((HIDDEN, OUT_PADDED), resident),           # w3 (padded)
            pl.BlockSpec((1, OUT_PADDED), resident),                # b3 (padded)
        ],
        out_specs=pl.BlockSpec((TB, OUT_PADDED), lambda i: (i, 0)),
        compiler_params=pltpu.CompilerParams(
            dimension_semantics=("parallel",),
            vmem_limit_bytes=VMEM_LIMIT_BYTES),
    )(x, w1p, b1p, w2p, b2p, w3p, b3p)

    # Drop the zero-padded logit lanes (rows beyond B only exist as masked
    # tile padding and are never read).
    return out[:, :OUT_FEATURES]


def init_params(key):
    """Deterministic init mimicking torch.nn.Linear (uniform(+-1/sqrt(fan_in)))."""
    def linear(k, fan_in, fan_out):
        kw, kb = jax.random.split(k)
        bound = 1.0 / jnp.sqrt(fan_in)
        # Stored as (in, out): kernel computes x @ W (== torch x @ W_t^T).
        w = jax.random.uniform(kw, (fan_in, fan_out), jnp.float32, -bound, bound)
        b = jax.random.uniform(kb, (fan_out,), jnp.float32, -bound, bound)
        return w, b

    k1, k2, k3 = jax.random.split(key, 3)
    w1, b1 = linear(k1, IN_FEATURES, HIDDEN)
    w2, b2 = linear(k2, HIDDEN, HIDDEN)
    w3, b3 = linear(k3, HIDDEN, OUT_FEATURES)
    return (w1, b1, w2, b2, w3, b3)


if __name__ == "__main__":
    key = jax.random.PRNGKey(0)
    k_params, k_x = jax.random.split(key)

    params = init_params(k_params)

    # Small batch consistent with the module's expected input (B, 1, 28, 28).
    B = 2
    x = jax.random.normal(k_x, (B, 1, 28, 28), jnp.float32)

    logits = fmnist_mlp_forward(x, params)
    logits = jax.block_until_ready(logits)

    # Sanity check vs a pure-JAX f32 reference of the same forward pass.
    # Tolerance reflects bf16 MXU inputs (accumulation is f32).
    w1, b1, w2, b2, w3, b3 = params
    xf = x.reshape(B, -1)
    ref = jnp.maximum(xf @ w1 + b1, 0.0)
    ref = jnp.maximum(ref @ w2 + b2, 0.0)
    ref = ref @ w3 + b3
    assert logits.shape == (B, OUT_FEATURES)
    assert jnp.allclose(logits, ref, atol=2e-2, rtol=2e-2), (
        float(jnp.max(jnp.abs(logits - ref))))

    print("KERNEL_OK")
</pallas_src>

<mosaic_0001>
module attributes {stable_mosaic.version = 11 : i64} {
  func.func @mlp_kernel(%arg0: i32, %arg1: memref<8x784xf32, #tpu.memory_space<vmem>>, %arg2: memref<784x512xbf16, #tpu.memory_space<vmem>>, %arg3: memref<1x512xf32, #tpu.memory_space<vmem>>, %arg4: memref<512x512xbf16, #tpu.memory_space<vmem>>, %arg5: memref<1x512xf32, #tpu.memory_space<vmem>>, %arg6: memref<512x128xbf16, #tpu.memory_space<vmem>>, %arg7: memref<1x128xf32, #tpu.memory_space<vmem>>, %arg8: memref<8x128xf32, #tpu.memory_space<vmem>>) attributes {dimension_semantics = [#tpu.dimension_semantics<parallel>], iteration_bounds = array<i64: 1>, scalar_prefetch = 0 : i64, scratch_operands = 0 : i64, tpu.core_type = #tpu.core_type<tc>, window_params = [{transform_indices = @transform_0, window_bounds = array<i64: 8, 784>}, {pipeline_mode = #tpu.pipeline_mode<synchronous>, transform_indices = @transform_1, window_bounds = array<i64: 784, 512>}, {pipeline_mode = #tpu.pipeline_mode<synchronous>, transform_indices = @transform_2, window_bounds = array<i64: 1, 512>}, {pipeline_mode = #tpu.pipeline_mode<synchronous>, transform_indices = @transform_3, window_bounds = array<i64: 512, 512>}, {pipeline_mode = #tpu.pipeline_mode<synchronous>, transform_indices = @transform_4, window_bounds = array<i64: 1, 512>}, {pipeline_mode = #tpu.pipeline_mode<synchronous>, transform_indices = @transform_5, window_bounds = array<i64: 512, 128>}, {pipeline_mode = #tpu.pipeline_mode<synchronous>, transform_indices = @transform_6, window_bounds = array<i64: 1, 128>}, {transform_indices = @transform_7, window_bounds = array<i64: 8, 128>}]} {
    %c0 = arith.constant 0 : index
    %c0_0 = arith.constant 0 : index
    %0 = vector.load %arg1[%c0, %c0_0] : memref<8x784xf32, #tpu.memory_space<vmem>>, vector<8x784xf32>
    %1 = arith.truncf %0 : vector<8x784xf32> to vector<8x784xbf16>
    %c0_1 = arith.constant 0 : index
    %c0_2 = arith.constant 0 : index
    %2 = vector.load %arg2[%c0_1, %c0_2] : memref<784x512xbf16, #tpu.memory_space<vmem>>, vector<784x512xbf16>
    %cst = arith.constant dense<0.000000e+00> : vector<8x512xf32>
    %3 = tpu.matmul %1, %2, %cst {dimension_numbers = #tpu.dot_dimension_numbers<[1], [0], [0], [1], [0, 0, 1, 1], [], []>} : vector<8x784xbf16>, vector<784x512xbf16>, vector<8x512xf32> -> vector<8x512xf32>
    %c0_3 = arith.constant 0 : index
    %c0_4 = arith.constant 0 : index
    %4 = vector.load %arg3[%c0_3, %c0_4] : memref<1x512xf32, #tpu.memory_space<vmem>>, vector<1x512xf32>
    %5 = vector.broadcast %4 : vector<1x512xf32> to vector<8x512xf32>
    %6 = arith.addf %3, %5 : vector<8x512xf32>
    %cst_5 = arith.constant 0.000000e+00 : f32
    %7 = vector.broadcast %cst_5 : f32 to vector<8x512xf32>
    %8 = arith.maximumf %6, %7 : vector<8x512xf32>
    %9 = arith.truncf %8 : vector<8x512xf32> to vector<8x512xbf16>
    %c0_6 = arith.constant 0 : index
    %c0_7 = arith.constant 0 : index
    %10 = vector.load %arg4[%c0_6, %c0_7] : memref<512x512xbf16, #tpu.memory_space<vmem>>, vector<512x512xbf16>
    %cst_8 = arith.constant dense<0.000000e+00> : vector<8x512xf32>
    %11 = tpu.matmul %9, %10, %cst_8 {dimension_numbers = #tpu.dot_dimension_numbers<[1], [0], [0], [1], [0, 0, 1, 1], [], []>} : vector<8x512xbf16>, vector<512x512xbf16>, vector<8x512xf32> -> vector<8x512xf32>
    %c0_9 = arith.constant 0 : index
    %c0_10 = arith.constant 0 : index
    %12 = vector.load %arg5[%c0_9, %c0_10] : memref<1x512xf32, #tpu.memory_space<vmem>>, vector<1x512xf32>
    %13 = vector.broadcast %12 : vector<1x512xf32> to vector<8x512xf32>
    %14 = arith.addf %11, %13 : vector<8x512xf32>
    %cst_11 = arith.constant 0.000000e+00 : f32
    %15 = vector.broadcast %cst_11 : f32 to vector<8x512xf32>
    %16 = arith.maximumf %14, %15 : vector<8x512xf32>
    %17 = arith.truncf %16 : vector<8x512xf32> to vector<8x512xbf16>
    %c0_12 = arith.constant 0 : index
    %c0_13 = arith.constant 0 : index
    %18 = vector.load %arg6[%c0_12, %c0_13] : memref<512x128xbf16, #tpu.memory_space<vmem>>, vector<512x128xbf16>
    %cst_14 = arith.constant dense<0.000000e+00> : vector<8x128xf32>
    %19 = tpu.matmul %17, %18, %cst_14 {dimension_numbers = #tpu.dot_dimension_numbers<[1], [0], [0], [1], [0, 0, 1, 1], [], []>} : vector<8x512xbf16>, vector<512x128xbf16>, vector<8x128xf32> -> vector<8x128xf32>
    %c0_15 = arith.constant 0 : index
    %c0_16 = arith.constant 0 : index
    %20 = vector.load %arg7[%c0_15, %c0_16] : memref<1x128xf32, #tpu.memory_space<vmem>>, vector<1x128xf32>
    %21 = vector.broadcast %20 : vector<1x128xf32> to vector<8x128xf32>
    %22 = arith.addf %19, %21 : vector<8x128xf32>
    %c0_17 = arith.constant 0 : index
    %c0_18 = arith.constant 0 : index
    %23 = vector.load %arg8[%c0_17, %c0_18] : memref<8x128xf32, #tpu.memory_space<vmem>>, vector<8x128xf32>
    tpu.vector_store %arg8[%c0_17, %c0_18], %22 {strides = array<i32>} : memref<8x128xf32, #tpu.memory_space<vmem>>, vector<8x128xf32>,
    return
  }
  func.func @transform_0(%arg0: i32) -> (i32, i32) {
    %c0_i32 = arith.constant 0 : i32
    %c0_i32_0 = arith.constant 0 : i32
    return %arg0, %c0_i32 : i32, i32
  }
  func.func @transform_1(%arg0: i32) -> (i32, i32) {
    %c0_i32 = arith.constant 0 : i32
    %c0_i32_0 = arith.constant 0 : i32
    %c0_i32_1 = arith.constant 0 : i32
    return %c0_i32, %c0_i32_0 : i32, i32
  }
  func.func @transform_2(%arg0: i32) -> (i32, i32) {
    %c0_i32 = arith.constant 0 : i32
    %c0_i32_0 = arith.constant 0 : i32
    %c0_i32_1 = arith.constant 0 : i32
    return %c0_i32, %c0_i32_0 : i32, i32
  }
  func.func @transform_3(%arg0: i32) -> (i32, i32) {
    %c0_i32 = arith.constant 0 : i32
    %c0_i32_0 = arith.constant 0 : i32
    %c0_i32_1 = arith.constant 0 : i32
    return %c0_i32, %c0_i32_0 : i32, i32
  }
  func.func @transform_4(%arg0: i32) -> (i32, i32) {
    %c0_i32 = arith.constant 0 : i32
    %c0_i32_0 = arith.constant 0 : i32
    %c0_i32_1 = arith.constant 0 : i32
    return %c0_i32, %c0_i32_0 : i32, i32
  }
  func.func @transform_5(%arg0: i32) -> (i32, i32) {
    %c0_i32 = arith.constant 0 : i32
    %c0_i32_0 = arith.constant 0 : i32
    %c0_i32_1 = arith.constant 0 : i32
    return %c0_i32, %c0_i32_0 : i32, i32
  }
  func.func @transform_6(%arg0: i32) -> (i32, i32) {
    %c0_i32 = arith.constant 0 : i32
    %c0_i32_0 = arith.constant 0 : i32
    %c0_i32_1 = arith.constant 0 : i32
    return %c0_i32, %c0_i32_0 : i32, i32
  }
  func.func @transform_7(%arg0: i32) -> (i32, i32) {
    %c0_i32 = arith.constant 0 : i32
    %c0_i32_0 = arith.constant 0 : i32
    return %arg0, %c0_i32 : i32, i32
  }
}

</mosaic_0001>

<llo_original>
// kernel: tpu_custom_call.1
$region0: #{tpu_custom_call.1}
  #allocation0 [shape = 'u32[]', space=smem, size = 0x4, offset = 0x4, fixed_abs, tag = 'smem constant byte address 0x4 - core index']
  #allocation1 [shape = 'u32[144,128]{1,0:T(1,128)}', space=vmem, size = 0x12000, scoped, tag = 'internal scratch']
  %s0 = inlined_call_operand.hbm [shape: f32[2,784], index: 0, kind: input, shape index: {}]
  %s1 = inlined_call_operand.hbm [shape: bf16[784,512], index: 1, kind: input, shape index: {}]
  %s2 = inlined_call_operand.hbm [shape: f32[1,512], index: 2, kind: input, shape index: {}]
  %s3 = inlined_call_operand.hbm [shape: bf16[512,512], index: 3, kind: input, shape index: {}]
  %s4 = inlined_call_operand.vmem [shape: f32[1,512], index: 4, kind: input, shape index: {}]
  %s5 = inlined_call_operand.hbm [shape: bf16[512,128], index: 5, kind: input, shape index: {}]
  %s6 = inlined_call_operand.vmem [shape: f32[1,128], index: 6, kind: input, shape index: {}]
  %s7 = inlined_call_operand.hbm [shape: f32[2,128], index: 7, kind: output, shape index: {}]
  %s8 = sld [smem:[#allocation0]]
  $region58: #{tpu_custom_call.1} parent=0
    _
  %s10 = ssub.s32 1, %s8
  %s11 = scalar_select 0, %s10, %s8
  $region1: #{tpu_custom_call.1} parent=0
    #allocation2 [shape = 'u8[28672]{0}', space=vmem, size = 0x7000, scoped, tag = 'input window, operand 0, single buffered']
    #allocation3 [shape = 's32[1]{0}', space=sflag, size = 0x4, scoped, tag = 'scoped memory for tpu_custom_call.1']
    #allocation4 [shape = 's32[1]{0}', space=sflag, size = 0x4, scoped, tag = 'scoped memory for tpu_custom_call.1']
    #allocation5 [shape = 'u8[802816]{0}', space=vmem, size = 0xc4000, scoped, tag = 'input window, operand 1, single buffered']
    #allocation6 [shape = 's32[1]{0}', space=sflag, size = 0x4, scoped, tag = 'scoped memory for tpu_custom_call.1']
    #allocation7 [shape = 'u8[2048]{0}', space=vmem, size = 0x800, scoped, tag = 'input window, operand 2, single buffered']
    #allocation8 [shape = 'u8[524288]{0}', space=vmem, size = 0x80000, scoped, tag = 'input window, operand 3, single buffered']
    #allocation9 [shape = 's32[1]{0}', space=sflag, size = 0x4, scoped, tag = 'scoped memory for tpu_custom_call.1']
    #allocation10 [shape = 'u8[131072]{0}', space=vmem, size = 0x20000, scoped, tag = 'input window, operand 5, single buffered']
    #allocation11 [shape = 'u8[4096]{0}', space=vmem, size = 0x1000, scoped, tag = 'output window, operand 0, single buffered']
    %12 = vsyncpa [#allocation3], 0
    %13 = vsyncpa [#allocation6], 0
    %14 = vsyncpa [#allocation9], 0
    %15 = vsyncpa [#allocation4], 0
    // Predicated region
    $region2: #{tpu_custom_call.1} parent=1 // pred_check
      _
    $region3: #{tpu_custom_call.1} parent=1 // pred_check_branch
      %17 = sbr.rel (0) target = $region5
    $region4: #{tpu_custom_call.1} parent=1 // pred_region
      %s19 = ssub.s32 896, 224
      %20 = vsyncadd [#allocation3], %s19
      %s21 = sshll.u32 [#allocation2], 4
      %s22 = int_to_ptr.vmem [resolvable:$true] %s21
      %27 = dma.hbm_to_vmem [thread:$0]  %s0, 224, %s22, [#allocation3], 224, 224, 14
    $region5: #{tpu_custom_call.1} parent=1 // pred_fallthru
      _
    // Predicated region
    $region6: #{tpu_custom_call.1} parent=1 // pred_check
      _
    $region7: #{tpu_custom_call.1} parent=1 // pred_check_branch
      %29 = sbr.rel (0) target = $region9
    $region8: #{tpu_custom_call.1} parent=1 // pred_region
      %s31 = ssub.s32 25088, 25088
      %32 = vsyncadd [#allocation6], %s31
      %s33 = sshll.u32 [#allocation5], 4
      %s34 = int_to_ptr.vmem [resolvable:$true] %s33
      %39 = dma.hbm_to_vmem [thread:$0]  %s1, 25088, %s34, [#allocation6], 256, 256, 16
    $region9: #{tpu_custom_call.1} parent=1 // pred_fallthru
      _
    // Predicated region
    $region10: #{tpu_custom_call.1} parent=1 // pred_check
      _
    $region11: #{tpu_custom_call.1} parent=1 // pred_check_branch
      %41 = sbr.rel (0) target = $region13
    $region12: #{tpu_custom_call.1} parent=1 // pred_region
      %s43 = ssub.s32 64, 64
      %44 = vsyncadd [#allocation6], %s43
      %s46 = sshll.u32 [#allocation7], 4
      %s47 = int_to_ptr.vmem [resolvable:$true] %s46
      %49 = dma.hbm_to_vmem [thread:$0]  %s2, 64, %s47, [#allocation6]
    $region13: #{tpu_custom_call.1} parent=1 // pred_fallthru
      _
    // Predicated region
    $region14: #{tpu_custom_call.1} parent=1 // pred_check
      _
    $region15: #{tpu_custom_call.1} parent=1 // pred_check_branch
      %51 = sbr.rel (0) target = $region17
    $region16: #{tpu_custom_call.1} parent=1 // pred_region
      %s53 = ssub.s32 16384, 16384
      %54 = vsyncadd [#allocation9], %s53
      %s55 = sshll.u32 [#allocation8], 4
      %s56 = int_to_ptr.vmem [resolvable:$true] %s55
      %61 = dma.hbm_to_vmem [thread:$0]  %s3, 16384, %s56, [#allocation9], 256, 256, 16
    $region17: #{tpu_custom_call.1} parent=1 // pred_fallthru
      _
    // Predicated region
    $region18: #{tpu_custom_call.1} parent=1 // pred_check
      _
    $region19: #{tpu_custom_call.1} parent=1 // pred_check_branch
      %63 = sbr.rel (0) target = $region21
    $region20: #{tpu_custom_call.1} parent=1 // pred_region
      _
    $region21: #{tpu_custom_call.1} parent=1 // pred_fallthru
      _
    // Predicated region
    $region22: #{tpu_custom_call.1} parent=1 // pred_check
      _
    $region23: #{tpu_custom_call.1} parent=1 // pred_check_branch
      %65 = sbr.rel (0) target = $region25
    $region24: #{tpu_custom_call.1} parent=1 // pred_region
      %s67 = ssub.s32 4096, 4096
      %68 = vsyncadd [#allocation9], %s67
      %s69 = sshll.u32 [#allocation10], 4
      %s70 = int_to_ptr.vmem [resolvable:$true] %s69
      %75 = dma.hbm_to_vmem [thread:$0]  %s5, 4096, %s70, [#allocation9], 64, 64, 4
    $region25: #{tpu_custom_call.1} parent=1 // pred_fallthru
      _
    // Predicated region
    $region26: #{tpu_custom_call.1} parent=1 // pred_check
      _
    $region27: #{tpu_custom_call.1} parent=1 // pred_check_branch
      %77 = sbr.rel (0) target = $region29
    $region28: #{tpu_custom_call.1} parent=1 // pred_region
      _
    $region29: #{tpu_custom_call.1} parent=1 // pred_fallthru
      _
    // Predicated region
    $region30: #{tpu_custom_call.1} parent=1 // pred_check
      _
    $region31: #{tpu_custom_call.1} parent=1 // pred_check_branch
      %79 = sbr.rel (0) target = $region33
    $region32: #{tpu_custom_call.1} parent=1 // pred_region
      %80 = dma.done [#allocation3], 896
    $region33: #{tpu_custom_call.1} parent=1 // pred_fallthru
      _
    // Predicated region
    $region34: #{tpu_custom_call.1} parent=1 // pred_check
      _
    $region35: #{tpu_custom_call.1} parent=1 // pred_check_branch
      %82 = sbr.rel (0) target = $region37
    $region36: #{tpu_custom_call.1} parent=1 // pred_region
      %83 = dma.done [#allocation6], 25088
    $region37: #{tpu_custom_call.1} parent=1 // pred_fallthru
      _
    // Predicated region
    $region38: #{tpu_custom_call.1} parent=1 // pred_check
      _
    $region39: #{tpu_custom_call.1} parent=1 // pred_check_branch
      %85 = sbr.rel (0) target = $region41
    $region40: #{tpu_custom_call.1} parent=1 // pred_region
      %86 = dma.done [#allocation6], 64
    $region41: #{tpu_custom_call.1} parent=1 // pred_fallthru
      _
    // Predicated region
    $region42: #{tpu_custom_call.1} parent=1 // pred_check
      _
    $region43: #{tpu_custom_call.1} parent=1 // pred_check_branch
      %88 = sbr.rel (0) target = $region45
    $region44: #{tpu_custom_call.1} parent=1 // pred_region
      %89 = dma.done [#allocation9], 16384
    $region45: #{tpu_custom_call.1} parent=1 // pred_fallthru
      _
    // Predicated region
    $region46: #{tpu_custom_call.1} parent=1 // pred_check
      _
    $region47: #{tpu_custom_call.1} parent=1 // pred_check_branch
      %91 = sbr.rel (0) target = $region49
    $region48: #{tpu_custom_call.1} parent=1 // pred_region
      %92 = dma.done [#allocation9], 4096
    $region49: #{tpu_custom_call.1} parent=1 // pred_fallthru
      _
    %v94 = vld [vmem:[#allocation2] sm:$0xff]
    %v95 = vld [vmem:[#allocation2 + $0x8] sm:$0x3f]
    %v96 = vld [vmem:[#allocation2 + $0xe] sm:$0xff]
    %v97 = vld [vmem:[#allocation2 + $0x16] sm:$0x3f]
    %v98 = vld [vmem:[#allocation2 + $0x1c] sm:$0xff]
    %v99 = vld [vmem:[#allocation2 + $0x24] sm:$0x3f]
    %v100 = vld [vmem:[#allocation2 + $0x2a] sm:$0xff]
    %v101 = vld [vmem:[#allocation2 + $0x32] sm:$0x3f]
    %v110 = vcombine.low %v94, %v96
    %v111 = vcombine.high %v94, %v96
    %v112 = vcombine.low %v98, %v100
    %v113 = vcombine.high %v98, %v100
    %v115 = vunpack.c.l.s4 1983009808
    %v116 = vunpack.c.0.s8 %v115
    %v117 = vlaneseq
    %v118 = vshrl.u32 %v117, 7
    %v119 = vsub.s32 %v116, %v118
    %v120 = vrot.slane %v110, %v119
    %v122 = vunpack.c.l.s4 1983009808
    %v123 = vunpack.c.0.s8 %v122
    %v124 = vlaneseq
    %v125 = vshrl.u32 %v124, 7
    %v126 = vsub.s32 %v123, %v125
    %v127 = vrot.slane %v111, %v126
    %v129 = vunpack.c.l.s4 1983009808
    %v130 = vunpack.c.0.s8 %v129
    %v131 = vlaneseq
    %v132 = vshrl.u32 %v131, 7
    %v133 = vsub.s32 %v130, %v132
    %v134 = vrot.slane %v112, %v133
    %v136 = vunpack.c.l.s4 1983009808
    %v137 = vunpack.c.0.s8 %v136
    %v138 = vlaneseq
    %v139 = vshrl.u32 %v138, 7
    %v140 = vsub.s32 %v137, %v139
    %v141 = vrot.slane %v113, %v140
    %v142 = vcombine.low %v120, %v134
    %v143 = vcombine.high %v120, %v134
    %v144 = vcombine.low %v127, %v141
    %v145 = vcombine.high %v127, %v141
    %v146 = vcombine.low %v95, %v97
    %v147 = vcombine.high %v95, %v97
    %v148 = vcombine.low %v99, %v101
    %v149 = vcombine.high %v99, %v101
    %v151 = vunpack.c.l.s4 1983009808
    %v152 = vunpack.c.0.s8 %v151
    %v153 = vlaneseq
    %v154 = vshrl.u32 %v153, 7
    %v155 = vsub.s32 %v152, %v154
    %v156 = vrot.slane %v146, %v155
    %v158 = vunpack.c.l.s4 1983009808
    %v159 = vunpack.c.0.s8 %v158
    %v160 = vlaneseq
    %v161 = vshrl.u32 %v160, 7
    %v162 = vsub.s32 %v159, %v161
    %v163 = vrot.slane %v147, %v162
    %v165 = vunpack.c.l.s4 1983009808
    %v166 = vunpack.c.0.s8 %v165
    %v167 = vlaneseq
    %v168 = vshrl.u32 %v167, 7
    %v169 = vsub.s32 %v166, %v168
    %v170 = vrot.slane %v148, %v169
    %v172 = vunpack.c.l.s4 1983009808
    %v173 = vunpack.c.0.s8 %v172
    %v174 = vlaneseq
    %v175 = vshrl.u32 %v174, 7
    %v176 = vsub.s32 %v173, %v175
    %v177 = vrot.slane %v149, %v176
    %v178 = vcombine.low %v156, %v170
    %v179 = vcombine.high %v156, %v170
    %v180 = vcombine.low %v163, %v177
    %v188 = vpack.c.bf16 %v142, %v142
    %v189 = vpack.c.bf16 %v143, %v143
    %v190 = vpack.c.bf16 %v144, %v144
    %v191 = vpack.c.bf16 %v145, %v145
    %v192 = vpack.c.bf16 %v178, %v178
    %v193 = vpack.c.bf16 %v179, %v179
    %v194 = vpack.c.bf16 %v180, %v180
    %v195 = vld [vmem:[#allocation5] sm:$0xff]
    %v196 = vld [vmem:[#allocation5 + $0x8] sm:$0xff]
    %v197 = vld [vmem:[#allocation5 + $0x10] sm:$0xff]
    %v198 = vld [vmem:[#allocation5 + $0x18] sm:$0xff]
    %v199 = vld [vmem:[#allocation5 + $0x20] sm:$0xff]
    %v200 = vld [vmem:[#allocation5 + $0x28] sm:$0xff]
    %v201 = vld [vmem:[#allocation5 + $0x30] sm:$0xff]
    %v202 = vld [vmem:[#allocation5 + $0x38] sm:$0xff]
    %v203 = vld [vmem:[#allocation5 + $0x40] sm:$0xff]
    %v204 = vld [vmem:[#allocation5 + $0x48] sm:$0xff]
    %v205 = vld [vmem:[#allocation5 + $0x50] sm:$0xff]
    %v206 = vld [vmem:[#allocation5 + $0x58] sm:$0xff]
    %v207 = vld [vmem:[#allocation5 + $0x60] sm:$0xff]
    %v208 = vld [vmem:[#allocation5 + $0x68] sm:$0xff]
    %v209 = vld [vmem:[#allocation5 + $0x70] sm:$0xff]
    %v210 = vld [vmem:[#allocation5 + $0x78] sm:$0xff]
    %v211 = vld [vmem:[#allocation5 + $0x80] sm:$0xff]
    %v212 = vld [vmem:[#allocation5 + $0x88] sm:$0xff]
    %v213 = vld [vmem:[#allocation5 + $0x90] sm:$0xff]
    %v214 = vld [vmem:[#allocation5 + $0x98] sm:$0xff]
    %v215 = vld [vmem:[#allocation5 + $0xa0] sm:$0xff]
    %v216 = vld [vmem:[#allocation5 + $0xa8] sm:$0xff]
    %v217 = vld [vmem:[#allocation5 + $0xb0] sm:$0xff]
    %v218 = vld [vmem:[#allocation5 + $0xb8] sm:$0xff]
    %v219 = vld [vmem:[#allocation5 + $0xc0] sm:$0xff]
    %v220 = vld [vmem:[#allocation5 + $0xc8] sm:$0xff]
    %v221 = vld [vmem:[#allocation5 + $0xd0] sm:$0xff]
    %v222 = vld [vmem:[#allocation5 + $0xd8] sm:$0xff]
    %v223 = vld [vmem:[#allocation5 + $0xe0] sm:$0xff]
    %v224 = vld [vmem:[#allocation5 + $0xe8] sm:$0xff]
    %v225 = vld [vmem:[#allocation5 + $0xf0] sm:$0xff]
    %v226 = vld [vmem:[#allocation5 + $0xf8] sm:$0xff]
    %v227 = vld [vmem:[#allocation5 + $0x100] sm:$0xff]
    %v228 = vld [vmem:[#allocation5 + $0x108] sm:$0xff]
    %v229 = vld [vmem:[#allocation5 + $0x110] sm:$0xff]
    %v230 = vld [vmem:[#allocation5 + $0x118] sm:$0xff]
    %v231 = vld [vmem:[#allocation5 + $0x120] sm:$0xff]
    %v232 = vld [vmem:[#allocation5 + $0x128] sm:$0xff]
    %v233 = vld [vmem:[#allocation5 + $0x130] sm:$0xff]
    %v234 = vld [vmem:[#allocation5 + $0x138] sm:$0xff]
    %v235 = vld [vmem:[#allocation5 + $0x140] sm:$0xff]
    %v236 = vld [vmem:[#allocation5 + $0x148] sm:$0xff]
    %v237 = vld [vmem:[#allocation5 + $0x150] sm:$0xff]
    %v238 = vld [vmem:[#allocation5 + $0x158] sm:$0xff]
    %v239 = vld [vmem:[#allocation5 + $0x160] sm:$0xff]
    %v240 = vld [vmem:[#allocation5 + $0x168] sm:$0xff]
    %v241 = vld [vmem:[#allocation5 + $0x170] sm:$0xff]
    %v242 = vld [vmem:[#allocation5 + $0x178] sm:$0xff]
    %v243 = vld [vmem:[#allocation5 + $0x180] sm:$0xff]
    %v244 = vld [vmem:[#allocation5 + $0x188] sm:$0xff]
    %v245 = vld [vmem:[#allocation5 + $0x190] sm:$0xff]
    %v246 = vld [vmem:[#allocation5 + $0x198] sm:$0xff]
    %v247 = vld [vmem:[#allocation5 + $0x1a0] sm:$0xff]
    %v248 = vld [vmem:[#allocation5 + $0x1a8] sm:$0xff]
    %v249 = vld [vmem:[#allocation5 + $0x1b0] sm:$0xff]
    %v250 = vld [vmem:[#allocation5 + $0x1b8] sm:$0xff]
    %v251 = vld [vmem:[#allocation5 + $0x1c0] sm:$0xff]
    %v252 = vld [vmem:[#allocation5 + $0x1c8] sm:$0xff]
    %v253 = vld [vmem:[#allocation5 + $0x1d0] sm:$0xff]
    %v254 = vld [vmem:[#allocation5 + $0x1d8] sm:$0xff]
    %v255 = vld [vmem:[#allocation5 + $0x1e0] sm:$0xff]
    %v256 = vld [vmem:[#allocation5 + $0x1e8] sm:$0xff]
    %v257 = vld [vmem:[#allocation5 + $0x1f0] sm:$0xff]
    %v258 = vld [vmem:[#allocation5 + $0x1f8] sm:$0xff]
    %v259 = vld [vmem:[#allocation5 + $0x200] sm:$0xff]
    %v260 = vld [vmem:[#allocation5 + $0x208] sm:$0xff]
    %v261 = vld [vmem:[#allocation5 + $0x210] sm:$0xff]
    %v262 = vld [vmem:[#allocation5 + $0x218] sm:$0xff]
    %v263 = vld [vmem:[#allocation5 + $0x220] sm:$0xff]
    %v264 = vld [vmem:[#allocation5 + $0x228] sm:$0xff]
    %v265 = vld [vmem:[#allocation5 + $0x230] sm:$0xff]
    %v266 = vld [vmem:[#allocation5 + $0x238] sm:$0xff]
    %v267 = vld [vmem:[#allocation5 + $0x240] sm:$0xff]
    %v268 = vld [vmem:[#allocation5 + $0x248] sm:$0xff]
    %v269 = vld [vmem:[#allocation5 + $0x250] sm:$0xff]
    %v270 = vld [vmem:[#allocation5 + $0x258] sm:$0xff]
    %v271 = vld [vmem:[#allocation5 + $0x260] sm:$0xff]
    %v272 = vld [vmem:[#allocation5 + $0x268] sm:$0xff]
    %v273 = vld [vmem:[#allocation5 + $0x270] sm:$0xff]
    %v274 = vld [vmem:[#allocation5 + $0x278] sm:$0xff]
    %v275 = vld [vmem:[#allocation5 + $0x280] sm:$0xff]
    %v276 = vld [vmem:[#allocation5 + $0x288] sm:$0xff]
    %v277 = vld [vmem:[#allocation5 + $0x290] sm:$0xff]
    %v278 = vld [vmem:[#allocation5 + $0x298] sm:$0xff]
    %v279 = vld [vmem:[#allocation5 + $0x2a0] sm:$0xff]
    %v280 = vld [vmem:[#allocation5 + $0x2a8] sm:$0xff]
    %v281 = vld [vmem:[#allocation5 + $0x2b0] sm:$0xff]
    %v282 = vld [vmem:[#allocation5 + $0x2b8] sm:$0xff]
    %v283 = vld [vmem:[#allocation5 + $0x2c0] sm:$0xff]
    %v284 = vld [vmem:[#allocation5 + $0x2c8] sm:$0xff]
    %v285 = vld [vmem:[#allocation5 + $0x2d0] sm:$0xff]
    %v286 = vld [vmem:[#allocation5 + $0x2d8] sm:$0xff]
    %v287 = vld [vmem:[#allocation5 + $0x2e0] sm:$0xff]
    %v288 = vld [vmem:[#allocation5 + $0x2e8] sm:$0xff]
    %v289 = vld [vmem:[#allocation5 + $0x2f0] sm:$0xff]
    %v290 = vld [vmem:[#allocation5 + $0x2f8] sm:$0xff]
    %v291 = vld [vmem:[#allocation5 + $0x300] sm:$0xff]
    %v292 = vld [vmem:[#allocation5 + $0x308] sm:$0xff]
    %v293 = vld [vmem:[#allocation5 + $0x310] sm:$0xff]
    %v294 = vld [vmem:[#allocation5 + $0x318] sm:$0xff]
    %v295 = vld [vmem:[#allocation5 + $0x320] sm:$0xff]
    %v296 = vld [vmem:[#allocation5 + $0x328] sm:$0xff]
    %v297 = vld [vmem:[#allocation5 + $0x330] sm:$0xff]
    %v298 = vld [vmem:[#allocation5 + $0x338] sm:$0xff]
    %v299 = vld [vmem:[#allocation5 + $0x340] sm:$0xff]
    %v300 = vld [vmem:[#allocation5 + $0x348] sm:$0xff]
    %v301 = vld [vmem:[#allocation5 + $0x350] sm:$0xff]
    %v302 = vld [vmem:[#allocation5 + $0x358] sm:$0xff]
    %v303 = vld [vmem:[#allocation5 + $0x360] sm:$0xff]
    %v304 = vld [vmem:[#allocation5 + $0x368] sm:$0xff]
    %v305 = vld [vmem:[#allocation5 + $0x370] sm:$0xff]
    %v306 = vld [vmem:[#allocation5 + $0x378] sm:$0xff]
    %v307 = vld [vmem:[#allocation5 + $0x380] sm:$0xff]
    %v308 = vld [vmem:[#allocation5 + $0x388] sm:$0xff]
    %v309 = vld [vmem:[#allocation5 + $0x390] sm:$0xff]
    %v310 = vld [vmem:[#allocation5 + $0x398] sm:$0xff]
    %v311 = vld [vmem:[#allocation5 + $0x3a0] sm:$0xff]
    %v312 = vld [vmem:[#allocation5 + $0x3a8] sm:$0xff]
    %v313 = vld [vmem:[#allocation5 + $0x3b0] sm:$0xff]
    %v314 = vld [vmem:[#allocation5 + $0x3b8] sm:$0xff]
    %v315 = vld [vmem:[#allocation5 + $0x3c0] sm:$0xff]
    %v316 = vld [vmem:[#allocation5 + $0x3c8] sm:$0xff]
    %v317 = vld [vmem:[#allocation5 + $0x3d0] sm:$0xff]
    %v318 = vld [vmem:[#allocation5 + $0x3d8] sm:$0xff]
    %v319 = vld [vmem:[#allocation5 + $0x3e0] sm:$0xff]
    %v320 = vld [vmem:[#allocation5 + $0x3e8] sm:$0xff]
    %v321 = vld [vmem:[#allocation5 + $0x3f0] sm:$0xff]
    %v322 = vld [vmem:[#allocation5 + $0x3f8] sm:$0xff]
    %v323 = vld [vmem:[#allocation5 + $0x400] sm:$0xff]
    %v324 = vld [vmem:[#allocation5 + $0x408] sm:$0xff]
    %v325 = vld [vmem:[#allocation5 + $0x410] sm:$0xff]
    %v326 = vld [vmem:[#allocation5 + $0x418] sm:$0xff]
    %v327 = vld [vmem:[#allocation5 + $0x420] sm:$0xff]
    %v328 = vld [vmem:[#allocation5 + $0x428] sm:$0xff]
    %v329 = vld [vmem:[#allocation5 + $0x430] sm:$0xff]
    %v330 = vld [vmem:[#allocation5 + $0x438] sm:$0xff]
    %v331 = vld [vmem:[#allocation5 + $0x440] sm:$0xff]
    %v332 = vld [vmem:[#allocation5 + $0x448] sm:$0xff]
    %v333 = vld [vmem:[#allocation5 + $0x450] sm:$0xff]
    %v334 = vld [vmem:[#allocation5 + $0x458] sm:$0xff]
    %v335 = vld [vmem:[#allocation5 + $0x460] sm:$0xff]
    %v336 = vld [vmem:[#allocation5 + $0x468] sm:$0xff]
    %v337 = vld [vmem:[#allocation5 + $0x470] sm:$0xff]
    %v338 = vld [vmem:[#allocation5 + $0x478] sm:$0xff]
    %v339 = vld [vmem:[#allocation5 + $0x480] sm:$0xff]
    %v340 = vld [vmem:[#allocation5 + $0x488] sm:$0xff]
    %v341 = vld [vmem:[#allocation5 + $0x490] sm:$0xff]
    %v342 = vld [vmem:[#allocation5 + $0x498] sm:$0xff]
    %v343 = vld [vmem:[#allocation5 + $0x4a0] sm:$0xff]
    %v344 = vld [vmem:[#allocation5 + $0x4a8] sm:$0xff]
    %v345 = vld [vmem:[#allocation5 + $0x4b0] sm:$0xff]
    %v346 = vld [vmem:[#allocation5 + $0x4b8] sm:$0xff]
    %v347 = vld [vmem:[#allocation5 + $0x4c0] sm:$0xff]
    %v348 = vld [vmem:[#allocation5 + $0x4c8] sm:$0xff]
    %v349 = vld [vmem:[#allocation5 + $0x4d0] sm:$0xff]
    %v350 = vld [vmem:[#allocation5 + $0x4d8] sm:$0xff]
    %v351 = vld [vmem:[#allocation5 + $0x4e0] sm:$0xff]
    %v352 = vld [vmem:[#allocation5 + $0x4e8] sm:$0xff]
    %v353 = vld [vmem:[#allocation5 + $0x4f0] sm:$0xff]
    %v354 = vld [vmem:[#allocation5 + $0x4f8] sm:$0xff]
    %v355 = vld [vmem:[#allocation5 + $0x500] sm:$0xff]
    %v356 = vld [vmem:[#allocation5 + $0x508] sm:$0xff]
    %v357 = vld [vmem:[#allocation5 + $0x510] sm:$0xff]
    %v358 = vld [vmem:[#allocation5 + $0x518] sm:$0xff]
    %v359 = vld [vmem:[#allocation5 + $0x520] sm:$0xff]
    %v360 = vld [vmem:[#allocation5 + $0x528] sm:$0xff]
    %v361 = vld [vmem:[#allocation5 + $0x530] sm:$0xff]
    %v362 = vld [vmem:[#allocation5 + $0x538] sm:$0xff]
    %v363 = vld [vmem:[#allocation5 + $0x540] sm:$0xff]
    %v364 = vld [vmem:[#allocation5 + $0x548] sm:$0xff]
    %v365 = vld [vmem:[#allocation5 + $0x550] sm:$0xff]
    %v366 = vld [vmem:[#allocation5 + $0x558] sm:$0xff]
    %v367 = vld [vmem:[#allocation5 + $0x560] sm:$0xff]
    %v368 = vld [vmem:[#allocation5 + $0x568] sm:$0xff]
    %v369 = vld [vmem:[#allocation5 + $0x570] sm:$0xff]
    %v370 = vld [vmem:[#allocation5 + $0x578] sm:$0xff]
    %v371 = vld [vmem:[#allocation5 + $0x580] sm:$0xff]
    %v372 = vld [vmem:[#allocation5 + $0x588] sm:$0xff]
    %v373 = vld [vmem:[#allocation5 + $0x590] sm:$0xff]
    %v374 = vld [vmem:[#allocation5 + $0x598] sm:$0xff]
    %v375 = vld [vmem:[#allocation5 + $0x5a0] sm:$0xff]
    %v376 = vld [vmem:[#allocation5 + $0x5a8] sm:$0xff]
    %v377 = vld [vmem:[#allocation5 + $0x5b0] sm:$0xff]
    %v378 = vld [vmem:[#allocation5 + $0x5b8] sm:$0xff]
    %v379 = vld [vmem:[#allocation5 + $0x5c0] sm:$0xff]
    %v380 = vld [vmem:[#allocation5 + $0x5c8] sm:$0xff]
    %v381 = vld [vmem:[#allocation5 + $0x5d0] sm:$0xff]
    %v382 = vld [vmem:[#allocation5 + $0x5d8] sm:$0xff]
    %v383 = vld [vmem:[#allocation5 + $0x5e0] sm:$0xff]
    %v384 = vld [vmem:[#allocation5 + $0x5e8] sm:$0xff]
    %v385 = vld [vmem:[#allocation5 + $0x5f0] sm:$0xff]
    %v386 = vld [vmem:[#allocation5 + $0x5f8] sm:$0xff]
    %v387 = vld [vmem:[#allocation5 + $0x600] sm:$0xff]
    %v388 = vld [vmem:[#allocation5 + $0x608] sm:$0xff]
    %v389 = vld [vmem:[#allocation5 + $0x610] sm:$0xff]
    %v390 = vld [vmem:[#allocation5 + $0x618] sm:$0xff]
    %v391 = vld [vmem:[#allocation7] sm:$0xf]
    %v393 = vlaneseq
    %v394 = vshrl.u32 %v393, 7
    %v395 = vsub.s32 0, %v394
    %v396 = vrot.slane %v391, %v395
    %v397 = vlaneseq
    %v398 = vshrl.u32 %v397, 7
    %v399 = vsub.s32 1, %v398
    %v400 = vrot.slane %v391, %v399
    %v401 = vlaneseq
    %v402 = vshrl.u32 %v401, 7
    %v403 = vsub.s32 2, %v402
    %v404 = vrot.slane %v391, %v403
    %v405 = vlaneseq
    %v406 = vshrl.u32 %v405, 7
    %v407 = vsub.s32 3, %v406
    %v408 = vrot.slane %v391, %v407
    %v609 = vunpack.c.l.b16 %v195
    %v610 = vunpack.c.h.b16 %v195
    %v611 = vunpack.c.l.b16 %v196
    %v612 = vunpack.c.h.b16 %v196
    %v613 = vunpack.c.l.b16 %v197
    %v614 = vunpack.c.h.b16 %v197
    %v615 = vunpack.c.l.b16 %v198
    %v616 = vunpack.c.h.b16 %v198
    %v617 = vunpack.c.l.b16 %v199
    %v618 = vunpack.c.h.b16 %v199
    %v619 = vunpack.c.l.b16 %v200
    %v620 = vunpack.c.h.b16 %v200
    %v621 = vunpack.c.l.b16 %v201
    %v622 = vunpack.c.h.b16 %v201
    %v623 = vunpack.c.l.b16 %v202
    %v624 = vunpack.c.h.b16 %v202
    %v625 = vunpack.c.l.b16 %v203
    %v626 = vunpack.c.h.b16 %v203
    %v627 = vunpack.c.l.b16 %v204
    %v628 = vunpack.c.h.b16 %v204
    %v629 = vunpack.c.l.b16 %v205
    %v630 = vunpack.c.h.b16 %v205
    %v631 = vunpack.c.l.b16 %v206
    %v632 = vunpack.c.h.b16 %v206
    %v633 = vunpack.c.l.b16 %v207
    %v634 = vunpack.c.h.b16 %v207
    %v635 = vunpack.c.l.b16 %v208
    %v636 = vunpack.c.h.b16 %v208
    %v637 = vunpack.c.l.b16 %v209
    %v638 = vunpack.c.h.b16 %v209
    %v639 = vunpack.c.l.b16 %v210
    %v640 = vunpack.c.h.b16 %v210
    %v641 = vunpack.c.l.b16 %v211
    %v642 = vunpack.c.h.b16 %v211
    %v643 = vunpack.c.l.b16 %v212
    %v644 = vunpack.c.h.b16 %v212
    %v645 = vunpack.c.l.b16 %v213
    %v646 = vunpack.c.h.b16 %v213
    %v647 = vunpack.c.l.b16 %v214
    %v648 = vunpack.c.h.b16 %v214
    %v649 = vunpack.c.l.b16 %v215
    %v650 = vunpack.c.h.b16 %v215
    %v651 = vunpack.c.l.b16 %v216
    %v652 = vunpack.c.h.b16 %v216
    %v653 = vunpack.c.l.b16 %v217
    %v654 = vunpack.c.h.b16 %v217
    %v655 = vunpack.c.l.b16 %v218
    %v656 = vunpack.c.h.b16 %v218
    %v657 = vunpack.c.l.b16 %v219
    %v658 = vunpack.c.h.b16 %v219
    %v659 = vunpack.c.l.b16 %v220
    %v660 = vunpack.c.h.b16 %v220
    %v661 = vunpack.c.l.b16 %v221
    %v662 = vunpack.c.h.b16 %v221
    %v663 = vunpack.c.l.b16 %v222
    %v664 = vunpack.c.h.b16 %v222
    %v665 = vunpack.c.l.b16 %v223
    %v666 = vunpack.c.h.b16 %v223
    %v667 = vunpack.c.l.b16 %v224
    %v668 = vunpack.c.h.b16 %v224
    %v669 = vunpack.c.l.b16 %v225
    %v670 = vunpack.c.h.b16 %v225
    %v671 = vunpack.c.l.b16 %v226
    %v672 = vunpack.c.h.b16 %v226
    %v673 = vunpack.c.l.b16 %v227
    %v674 = vunpack.c.h.b16 %v227
    %v675 = vunpack.c.l.b16 %v228
    %v676 = vunpack.c.h.b16 %v228
    %v677 = vunpack.c.l.b16 %v229
    %v678 = vunpack.c.h.b16 %v229
    %v679 = vunpack.c.l.b16 %v230
    %v680 = vunpack.c.h.b16 %v230
    %v681 = vunpack.c.l.b16 %v231
    %v682 = vunpack.c.h.b16 %v231
    %v683 = vunpack.c.l.b16 %v232
    %v684 = vunpack.c.h.b16 %v232
    %v685 = vunpack.c.l.b16 %v233
    %v686 = vunpack.c.h.b16 %v233
    %v687 = vunpack.c.l.b16 %v234
    %v688 = vunpack.c.h.b16 %v234
    %v689 = vunpack.c.l.b16 %v235
    %v690 = vunpack.c.h.b16 %v235
    %v691 = vunpack.c.l.b16 %v236
    %v692 = vunpack.c.h.b16 %v236
    %v693 = vunpack.c.l.b16 %v237
    %v694 = vunpack.c.h.b16 %v237
    %v695 = vunpack.c.l.b16 %v238
    %v696 = vunpack.c.h.b16 %v238
    %v697 = vunpack.c.l.b16 %v239
    %v698 = vunpack.c.h.b16 %v239
    %v699 = vunpack.c.l.b16 %v240
    %v700 = vunpack.c.h.b16 %v240
    %v701 = vunpack.c.l.b16 %v241
    %v702 = vunpack.c.h.b16 %v241
    %v703 = vunpack.c.l.b16 %v242
    %v704 = vunpack.c.h.b16 %v242
    %v705 = vunpack.c.l.b16 %v243
    %v706 = vunpack.c.h.b16 %v243
    %v707 = vunpack.c.l.b16 %v244
    %v708 = vunpack.c.h.b16 %v244
    %v709 = vunpack.c.l.b16 %v245
    %v710 = vunpack.c.h.b16 %v245
    %v711 = vunpack.c.l.b16 %v246
    %v712 = vunpack.c.h.b16 %v246
    %v713 = vunpack.c.l.b16 %v247
    %v714 = vunpack.c.h.b16 %v247
    %v715 = vunpack.c.l.b16 %v248
    %v716 = vunpack.c.h.b16 %v248
    %v717 = vunpack.c.l.b16 %v249
    %v718 = vunpack.c.h.b16 %v249
    %v719 = vunpack.c.l.b16 %v250
    %v720 = vunpack.c.h.b16 %v250
    %v721 = vunpack.c.l.b16 %v251
    %v722 = vunpack.c.h.b16 %v251
    %v723 = vunpack.c.l.b16 %v252
    %v724 = vunpack.c.h.b16 %v252
    %v725 = vunpack.c.l.b16 %v253
    %v726 = vunpack.c.h.b16 %v253
    %v727 = vunpack.c.l.b16 %v254
    %v728 = vunpack.c.h.b16 %v254
    %v729 = vunpack.c.l.b16 %v255
    %v730 = vunpack.c.h.b16 %v255
    %v731 = vunpack.c.l.b16 %v256
    %v732 = vunpack.c.h.b16 %v256
    %v733 = vunpack.c.l.b16 %v257
    %v734 = vunpack.c.h.b16 %v257
    %v735 = vunpack.c.l.b16 %v258
    %v736 = vunpack.c.h.b16 %v258
    %v737 = vunpack.c.l.b16 %v259
    %v738 = vunpack.c.h.b16 %v259
    %v739 = vunpack.c.l.b16 %v260
    %v740 = vunpack.c.h.b16 %v260
    %v741 = vunpack.c.l.b16 %v261
    %v742 = vunpack.c.h.b16 %v261
    %v743 = vunpack.c.l.b16 %v262
    %v744 = vunpack.c.h.b16 %v262
    %v745 = vunpack.c.l.b16 %v263
    %v746 = vunpack.c.h.b16 %v263
    %v747 = vunpack.c.l.b16 %v264
    %v748 = vunpack.c.h.b16 %v264
    %v749 = vunpack.c.l.b16 %v265
    %v750 = vunpack.c.h.b16 %v265
    %v751 = vunpack.c.l.b16 %v266
    %v752 = vunpack.c.h.b16 %v266
    %v753 = vunpack.c.l.b16 %v267
    %v754 = vunpack.c.h.b16 %v267
    %v755 = vunpack.c.l.b16 %v268
    %v756 = vunpack.c.h.b16 %v268
    %v757 = vunpack.c.l.b16 %v269
    %v758 = vunpack.c.h.b16 %v269
    %v759 = vunpack.c.l.b16 %v270
    %v760 = vunpack.c.h.b16 %v270
    %v761 = vunpack.c.l.b16 %v271
    %v762 = vunpack.c.h.b16 %v271
    %v763 = vunpack.c.l.b16 %v272
    %v764 = vunpack.c.h.b16 %v272
    %v765 = vunpack.c.l.b16 %v273
    %v766 = vunpack.c.h.b16 %v273
    %v767 = vunpack.c.l.b16 %v274
    %v768 = vunpack.c.h.b16 %v274
    %v769 = vunpack.c.l.b16 %v275
    %v770 = vunpack.c.h.b16 %v275
    %v771 = vunpack.c.l.b16 %v276
    %v772 = vunpack.c.h.b16 %v276
    %v773 = vunpack.c.l.b16 %v277
    %v774 = vunpack.c.h.b16 %v277
    %v775 = vunpack.c.l.b16 %v278
    %v776 = vunpack.c.h.b16 %v278
    %v777 = vunpack.c.l.b16 %v279
    %v778 = vunpack.c.h.b16 %v279
    %v779 = vunpack.c.l.b16 %v280
    %v780 = vunpack.c.h.b16 %v280
    %v781 = vunpack.c.l.b16 %v281
    %v782 = vunpack.c.h.b16 %v281
    %v783 = vunpack.c.l.b16 %v282
    %v784 = vunpack.c.h.b16 %v282
    %v785 = vunpack.c.l.b16 %v283
    %v786 = vunpack.c.h.b16 %v283
    %v787 = vunpack.c.l.b16 %v284
    %v788 = vunpack.c.h.b16 %v284
    %v789 = vunpack.c.l.b16 %v285
    %v790 = vunpack.c.h.b16 %v285
    %v791 = vunpack.c.l.b16 %v286
    %v792 = vunpack.c.h.b16 %v286
    %v793 = vunpack.c.l.b16 %v287
    %v794 = vunpack.c.h.b16 %v287
    %v795 = vunpack.c.l.b16 %v288
    %v796 = vunpack.c.h.b16 %v288
    %v797 = vunpack.c.l.b16 %v289
    %v798 = vunpack.c.h.b16 %v289
    %v799 = vunpack.c.l.b16 %v290
    %v800 = vunpack.c.h.b16 %v290
    %v801 = vunpack.c.l.b16 %v291
    %v802 = vunpack.c.h.b16 %v291
    %v803 = vunpack.c.l.b16 %v292
    %v804 = vunpack.c.h.b16 %v292
    %v805 = vunpack.c.l.b16 %v293
    %v806 = vunpack.c.h.b16 %v293
    %v807 = vunpack.c.l.b16 %v294
    %v808 = vunpack.c.h.b16 %v294
    %v809 = vunpack.c.l.b16 %v295
    %v810 = vunpack.c.h.b16 %v295
    %v811 = vunpack.c.l.b16 %v296
    %v812 = vunpack.c.h.b16 %v296
    %v813 = vunpack.c.l.b16 %v297
    %v814 = vunpack.c.h.b16 %v297
    %v815 = vunpack.c.l.b16 %v298
    %v816 = vunpack.c.h.b16 %v298
    %v817 = vunpack.c.l.b16 %v299
    %v818 = vunpack.c.h.b16 %v299
    %v819 = vunpack.c.l.b16 %v300
    %v820 = vunpack.c.h.b16 %v300
    %v821 = vunpack.c.l.b16 %v301
    %v822 = vunpack.c.h.b16 %v301
    %v823 = vunpack.c.l.b16 %v302
    %v824 = vunpack.c.h.b16 %v302
    %v825 = vunpack.c.l.b16 %v303
    %v826 = vunpack.c.h.b16 %v303
    %v827 = vunpack.c.l.b16 %v304
    %v828 = vunpack.c.h.b16 %v304
    %v829 = vunpack.c.l.b16 %v305
    %v830 = vunpack.c.h.b16 %v305
    %v831 = vunpack.c.l.b16 %v306
    %v832 = vunpack.c.h.b16 %v306
    %v833 = vunpack.c.l.b16 %v307
    %v834 = vunpack.c.h.b16 %v307
    %v835 = vunpack.c.l.b16 %v308
    %v836 = vunpack.c.h.b16 %v308
    %v837 = vunpack.c.l.b16 %v309
    %v838 = vunpack.c.h.b16 %v309
    %v839 = vunpack.c.l.b16 %v310
    %v840 = vunpack.c.h.b16 %v310
    %v841 = vunpack.c.l.b16 %v311
    %v842 = vunpack.c.h.b16 %v311
    %v843 = vunpack.c.l.b16 %v312
    %v844 = vunpack.c.h.b16 %v312
    %v845 = vunpack.c.l.b16 %v313
    %v846 = vunpack.c.h.b16 %v313
    %v847 = vunpack.c.l.b16 %v314
    %v848 = vunpack.c.h.b16 %v314
    %v849 = vunpack.c.l.b16 %v315
    %v850 = vunpack.c.h.b16 %v315
    %v851 = vunpack.c.l.b16 %v316
    %v852 = vunpack.c.h.b16 %v316
    %v853 = vunpack.c.l.b16 %v317
    %v854 = vunpack.c.h.b16 %v317
    %v855 = vunpack.c.l.b16 %v318
    %v856 = vunpack.c.h.b16 %v318
    %v857 = vunpack.c.l.b16 %v319
    %v858 = vunpack.c.h.b16 %v319
    %v859 = vunpack.c.l.b16 %v320
    %v860 = vunpack.c.h.b16 %v320
    %v861 = vunpack.c.l.b16 %v321
    %v862 = vunpack.c.h.b16 %v321
    %v863 = vunpack.c.l.b16 %v322
    %v864 = vunpack.c.h.b16 %v322
    %v865 = vunpack.c.l.b16 %v323
    %v866 = vunpack.c.h.b16 %v323
    %v867 = vunpack.c.l.b16 %v324
    %v868 = vunpack.c.h.b16 %v324
    %v869 = vunpack.c.l.b16 %v325
    %v870 = vunpack.c.h.b16 %v325
    %v871 = vunpack.c.l.b16 %v326
    %v872 = vunpack.c.h.b16 %v326
    %v873 = vunpack.c.l.b16 %v327
    %v874 = vunpack.c.h.b16 %v327
    %v875 = vunpack.c.l.b16 %v328
    %v876 = vunpack.c.h.b16 %v328
    %v877 = vunpack.c.l.b16 %v329
    %v878 = vunpack.c.h.b16 %v329
    %v879 = vunpack.c.l.b16 %v330
    %v880 = vunpack.c.h.b16 %v330
    %v881 = vunpack.c.l.b16 %v331
    %v882 = vunpack.c.h.b16 %v331
    %v883 = vunpack.c.l.b16 %v332
    %v884 = vunpack.c.h.b16 %v332
    %v885 = vunpack.c.l.b16 %v333
    %v886 = vunpack.c.h.b16 %v333
    %v887 = vunpack.c.l.b16 %v334
    %v888 = vunpack.c.h.b16 %v334
    %v889 = vunpack.c.l.b16 %v335
    %v890 = vunpack.c.h.b16 %v335
    %v891 = vunpack.c.l.b16 %v336
    %v892 = vunpack.c.h.b16 %v336
    %v893 = vunpack.c.l.b16 %v337
    %v894 = vunpack.c.h.b16 %v337
    %v895 = vunpack.c.l.b16 %v338
    %v896 = vunpack.c.h.b16 %v338
    %v897 = vunpack.c.l.b16 %v339
    %v898 = vunpack.c.h.b16 %v339
    %v899 = vunpack.c.l.b16 %v340
    %v900 = vunpack.c.h.b16 %v340
    %v901 = vunpack.c.l.b16 %v341
    %v902 = vunpack.c.h.b16 %v341
    %v903 = vunpack.c.l.b16 %v342
    %v904 = vunpack.c.h.b16 %v342
    %v905 = vunpack.c.l.b16 %v343
    %v906 = vunpack.c.h.b16 %v343
    %v907 = vunpack.c.l.b16 %v344
    %v908 = vunpack.c.h.b16 %v344
    %v909 = vunpack.c.l.b16 %v345
    %v910 = vunpack.c.h.b16 %v345
    %v911 = vunpack.c.l.b16 %v346
    %v912 = vunpack.c.h.b16 %v346
    %v913 = vunpack.c.l.b16 %v347
    %v914 = vunpack.c.h.b16 %v347
    %v915 = vunpack.c.l.b16 %v348
    %v916 = vunpack.c.h.b16 %v348
    %v917 = vunpack.c.l.b16 %v349
    %v918 = vunpack.c.h.b16 %v349
    %v919 = vunpack.c.l.b16 %v350
    %v920 = vunpack.c.h.b16 %v350
    %v921 = vunpack.c.l.b16 %v351
    %v922 = vunpack.c.h.b16 %v351
    %v923 = vunpack.c.l.b16 %v352
    %v924 = vunpack.c.h.b16 %v352
    %v925 = vunpack.c.l.b16 %v353
    %v926 = vunpack.c.h.b16 %v353
    %v927 = vunpack.c.l.b16 %v354
    %v928 = vunpack.c.h.b16 %v354
    %v929 = vunpack.c.l.b16 %v355
    %v930 = vunpack.c.h.b16 %v355
    %v931 = vunpack.c.l.b16 %v356
    %v932 = vunpack.c.h.b16 %v356
    %v933 = vunpack.c.l.b16 %v357
    %v934 = vunpack.c.h.b16 %v357
    %v935 = vunpack.c.l.b16 %v358
    %v936 = vunpack.c.h.b16 %v358
    %v937 = vunpack.c.l.b16 %v359
    %v938 = vunpack.c.h.b16 %v359
    %v939 = vunpack.c.l.b16 %v360
    %v940 = vunpack.c.h.b16 %v360
    %v941 = vunpack.c.l.b16 %v361
    %v942 = vunpack.c.h.b16 %v361
    %v943 = vunpack.c.l.b16 %v362
    %v944 = vunpack.c.h.b16 %v362
    %v945 = vunpack.c.l.b16 %v363
    %v946 = vunpack.c.h.b16 %v363
    %v947 = vunpack.c.l.b16 %v364
    %v948 = vunpack.c.h.b16 %v364
    %v949 = vunpack.c.l.b16 %v365
    %v950 = vunpack.c.h.b16 %v365
    %v951 = vunpack.c.l.b16 %v366
    %v952 = vunpack.c.h.b16 %v366
    %v953 = vunpack.c.l.b16 %v367
    %v954 = vunpack.c.h.b16 %v367
    %v955 = vunpack.c.l.b16 %v368
    %v956 = vunpack.c.h.b16 %v368
    %v957 = vunpack.c.l.b16 %v369
    %v958 = vunpack.c.h.b16 %v369
    %v959 = vunpack.c.l.b16 %v370
    %v960 = vunpack.c.h.b16 %v370
    %v961 = vunpack.c.l.b16 %v371
    %v962 = vunpack.c.h.b16 %v371
    %v963 = vunpack.c.l.b16 %v372
    %v964 = vunpack.c.h.b16 %v372
    %v965 = vunpack.c.l.b16 %v373
    %v966 = vunpack.c.h.b16 %v373
    %v967 = vunpack.c.l.b16 %v374
    %v968 = vunpack.c.h.b16 %v374
    %v969 = vunpack.c.l.b16 %v375
    %v970 = vunpack.c.h.b16 %v375
    %v971 = vunpack.c.l.b16 %v376
    %v972 = vunpack.c.h.b16 %v376
    %v973 = vunpack.c.l.b16 %v377
    %v974 = vunpack.c.h.b16 %v377
    %v975 = vunpack.c.l.b16 %v378
    %v976 = vunpack.c.h.b16 %v378
    %v977 = vunpack.c.l.b16 %v379
    %v978 = vunpack.c.h.b16 %v379
    %v979 = vunpack.c.l.b16 %v380
    %v980 = vunpack.c.h.b16 %v380
    %v981 = vunpack.c.l.b16 %v381
    %v982 = vunpack.c.h.b16 %v381
    %v983 = vunpack.c.l.b16 %v382
    %v984 = vunpack.c.h.b16 %v382
    %v985 = vunpack.c.l.b16 %v383
    %v986 = vunpack.c.h.b16 %v383
    %v987 = vunpack.c.l.b16 %v384
    %v988 = vunpack.c.h.b16 %v384
    %v989 = vunpack.c.l.b16 %v385
    %v990 = vunpack.c.h.b16 %v385
    %v991 = vunpack.c.l.b16 %v386
    %v992 = vunpack.c.h.b16 %v386
    %v993 = vunpack.c.l.b16 %v387
    %v994 = vunpack.c.h.b16 %v387
    %v995 = vunpack.c.l.b16 %v388
    %v996 = vunpack.c.h.b16 %v388
    %v997 = vunpack.c.l.b16 %v389
    %v998 = vunpack.c.h.b16 %v389
    %v999 = vunpack.c.l.b16 %v390
    %v1000 = vunpack.c.h.b16 %v390
    %v1001 = vpack.c.b16 %v613, %v609
    %v1002 = vpack.c.b16 %v614, %v610
    %v1003 = vpack.c.b16 %v615, %v611
    %v1004 = vpack.c.b16 %v616, %v612
    %v1005 = vpack.c.b16 %v621, %v617
    %v1006 = vpack.c.b16 %v622, %v618
    %v1007 = vpack.c.b16 %v623, %v619
    %v1008 = vpack.c.b16 %v624, %v620
    %v1009 = vpack.c.b16 %v629, %v625
    %v1010 = vpack.c.b16 %v630, %v626
    %v1011 = vpack.c.b16 %v631, %v627
    %v1012 = vpack.c.b16 %v632, %v628
    %v1013 = vpack.c.b16 %v637, %v633
    %v1014 = vpack.c.b16 %v638, %v634
    %v1015 = vpack.c.b16 %v639, %v635
    %v1016 = vpack.c.b16 %v640, %v636
    %v1017 = vpack.c.b16 %v645, %v641
    %v1018 = vpack.c.b16 %v646, %v642
    %v1019 = vpack.c.b16 %v647, %v643
    %v1020 = vpack.c.b16 %v648, %v644
    %v1021 = vpack.c.b16 %v653, %v649
    %v1022 = vpack.c.b16 %v654, %v650
    %v1023 = vpack.c.b16 %v655, %v651
    %v1024 = vpack.c.b16 %v656, %v652
    %v1025 = vpack.c.b16 %v661, %v657
    %v1026 = vpack.c.b16 %v662, %v658
    %v1027 = vpack.c.b16 %v663, %v659
    %v1028 = vpack.c.b16 %v664, %v660
    %v1029 = vpack.c.b16 %v669, %v665
    %v1030 = vpack.c.b16 %v670, %v666
    %v1031 = vpack.c.b16 %v671, %v667
    %v1032 = vpack.c.b16 %v672, %v668
    %v1033 = vpack.c.b16 %v677, %v673
    %v1034 = vpack.c.b16 %v678, %v674
    %v1035 = vpack.c.b16 %v679, %v675
    %v1036 = vpack.c.b16 %v680, %v676
    %v1037 = vpack.c.b16 %v685, %v681
    %v1038 = vpack.c.b16 %v686, %v682
    %v1039 = vpack.c.b16 %v687, %v683
    %v1040 = vpack.c.b16 %v688, %v684
    %v1041 = vpack.c.b16 %v693, %v689
    %v1042 = vpack.c.b16 %v694, %v690
    %v1043 = vpack.c.b16 %v695, %v691
    %v1044 = vpack.c.b16 %v696, %v692
    %v1045 = vpack.c.b16 %v701, %v697
    %v1046 = vpack.c.b16 %v702, %v698
    %v1047 = vpack.c.b16 %v703, %v699
    %v1048 = vpack.c.b16 %v704, %v700
    %v1049 = vpack.c.b16 %v709, %v705
    %v1050 = vpack.c.b16 %v710, %v706
    %v1051 = vpack.c.b16 %v711, %v707
    %v1052 = vpack.c.b16 %v712, %v708
    %v1053 = vpack.c.b16 %v717, %v713
    %v1054 = vpack.c.b16 %v718, %v714
    %v1055 = vpack.c.b16 %v719, %v715
    %v1056 = vpack.c.b16 %v720, %v716
    %v1057 = vpack.c.b16 %v725, %v721
    %v1058 = vpack.c.b16 %v726, %v722
    %v1059 = vpack.c.b16 %v727, %v723
    %v1060 = vpack.c.b16 %v728, %v724
    %v1061 = vpack.c.b16 %v733, %v729
    %v1062 = vpack.c.b16 %v734, %v730
    %v1063 = vpack.c.b16 %v735, %v731
    %v1064 = vpack.c.b16 %v736, %v732
    %v1065 = vpack.c.b16 %v741, %v737
    %v1066 = vpack.c.b16 %v742, %v738
    %v1067 = vpack.c.b16 %v743, %v739
    %v1068 = vpack.c.b16 %v744, %v740
    %v1069 = vpack.c.b16 %v749, %v745
    %v1070 = vpack.c.b16 %v750, %v746
    %v1071 = vpack.c.b16 %v751, %v747
    %v1072 = vpack.c.b16 %v752, %v748
    %v1073 = vpack.c.b16 %v757, %v753
    %v1074 = vpack.c.b16 %v758, %v754
    %v1075 = vpack.c.b16 %v759, %v755
    %v1076 = vpack.c.b16 %v760, %v756
    %v1077 = vpack.c.b16 %v765, %v761
    %v1078 = vpack.c.b16 %v766, %v762
    %v1079 = vpack.c.b16 %v767, %v763
    %v1080 = vpack.c.b16 %v768, %v764
    %v1081 = vpack.c.b16 %v773, %v769
    %v1082 = vpack.c.b16 %v774, %v770
    %v1083 = vpack.c.b16 %v775, %v771
    %v1084 = vpack.c.b16 %v776, %v772
    %v1085 = vpack.c.b16 %v781, %v777
    %v1086 = vpack.c.b16 %v782, %v778
    %v1087 = vpack.c.b16 %v783, %v779
    %v1088 = vpack.c.b16 %v784, %v780
    %v1089 = vpack.c.b16 %v789, %v785
    %v1090 = vpack.c.b16 %v790, %v786
    %v1091 = vpack.c.b16 %v791, %v787
    %v1092 = vpack.c.b16 %v792, %v788
    %v1093 = vpack.c.b16 %v797, %v793
    %v1094 = vpack.c.b16 %v798, %v794
    %v1095 = vpack.c.b16 %v799, %v795
    %v1096 = vpack.c.b16 %v800, %v796
    %v1097 = vpack.c.b16 %v805, %v801
    %v1098 = vpack.c.b16 %v806, %v802
    %v1099 = vpack.c.b16 %v807, %v803
    %v1100 = vpack.c.b16 %v808, %v804
    %v1101 = vpack.c.b16 %v813, %v809
    %v1102 = vpack.c.b16 %v814, %v810
    %v1103 = vpack.c.b16 %v815, %v811
    %v1104 = vpack.c.b16 %v816, %v812
    %v1105 = vpack.c.b16 %v821, %v817
    %v1106 = vpack.c.b16 %v822, %v818
    %v1107 = vpack.c.b16 %v823, %v819
    %v1108 = vpack.c.b16 %v824, %v820
    %v1109 = vpack.c.b16 %v829, %v825
    %v1110 = vpack.c.b16 %v830, %v826
    %v1111 = vpack.c.b16 %v831, %v827
    %v1112 = vpack.c.b16 %v832, %v828
    %v1113 = vpack.c.b16 %v837, %v833
    %v1114 = vpack.c.b16 %v838, %v834
    %v1115 = vpack.c.b16 %v839, %v835
    %v1116 = vpack.c.b16 %v840, %v836
    %v1117 = vpack.c.b16 %v845, %v841
    %v1118 = vpack.c.b16 %v846, %v842
    %v1119 = vpack.c.b16 %v847, %v843
    %v1120 = vpack.c.b16 %v848, %v844
    %v1121 = vpack.c.b16 %v853, %v849
    %v1122 = vpack.c.b16 %v854, %v850
    %v1123 = vpack.c.b16 %v855, %v851
    %v1124 = vpack.c.b16 %v856, %v852
    %v1125 = vpack.c.b16 %v861, %v857
    %v1126 = vpack.c.b16 %v862, %v858
    %v1127 = vpack.c.b16 %v863, %v859
    %v1128 = vpack.c.b16 %v864, %v860
    %v1129 = vpack.c.b16 %v869, %v865
    %v1130 = vpack.c.b16 %v870, %v866
    %v1131 = vpack.c.b16 %v871, %v867
    %v1132 = vpack.c.b16 %v872, %v868
    %v1133 = vpack.c.b16 %v877, %v873
    %v1134 = vpack.c.b16 %v878, %v874
    %v1135 = vpack.c.b16 %v879, %v875
    %v1136 = vpack.c.b16 %v880, %v876
    %v1137 = vpack.c.b16 %v885, %v881
    %v1138 = vpack.c.b16 %v886, %v882
    %v1139 = vpack.c.b16 %v887, %v883
    %v1140 = vpack.c.b16 %v888, %v884
    %v1141 = vpack.c.b16 %v893, %v889
    %v1142 = vpack.c.b16 %v894, %v890
    %v1143 = vpack.c.b16 %v895, %v891
    %v1144 = vpack.c.b16 %v896, %v892
    %v1145 = vpack.c.b16 %v901, %v897
    %v1146 = vpack.c.b16 %v902, %v898
    %v1147 = vpack.c.b16 %v903, %v899
    %v1148 = vpack.c.b16 %v904, %v900
    %v1149 = vpack.c.b16 %v909, %v905
    %v1150 = vpack.c.b16 %v910, %v906
    %v1151 = vpack.c.b16 %v911, %v907
    %v1152 = vpack.c.b16 %v912, %v908
    %v1153 = vpack.c.b16 %v917, %v913
    %v1154 = vpack.c.b16 %v918, %v914
    %v1155 = vpack.c.b16 %v919, %v915
    %v1156 = vpack.c.b16 %v920, %v916
    %v1157 = vpack.c.b16 %v925, %v921
    %v1158 = vpack.c.b16 %v926, %v922
    %v1159 = vpack.c.b16 %v927, %v923
    %v1160 = vpack.c.b16 %v928, %v924
    %v1161 = vpack.c.b16 %v933, %v929
    %v1162 = vpack.c.b16 %v934, %v930
    %v1163 = vpack.c.b16 %v935, %v931
    %v1164 = vpack.c.b16 %v936, %v932
    %v1165 = vpack.c.b16 %v941, %v937
    %v1166 = vpack.c.b16 %v942, %v938
    %v1167 = vpack.c.b16 %v943, %v939
    %v1168 = vpack.c.b16 %v944, %v940
    %v1169 = vpack.c.b16 %v949, %v945
    %v1170 = vpack.c.b16 %v950, %v946
    %v1171 = vpack.c.b16 %v951, %v947
    %v1172 = vpack.c.b16 %v952, %v948
    %v1173 = vpack.c.b16 %v957, %v953
    %v1174 = vpack.c.b16 %v958, %v954
    %v1175 = vpack.c.b16 %v959, %v955
    %v1176 = vpack.c.b16 %v960, %v956
    %v1177 = vpack.c.b16 %v965, %v961
    %v1178 = vpack.c.b16 %v966, %v962
    %v1179 = vpack.c.b16 %v967, %v963
    %v1180 = vpack.c.b16 %v968, %v964
    %v1181 = vpack.c.b16 %v973, %v969
    %v1182 = vpack.c.b16 %v974, %v970
    %v1183 = vpack.c.b16 %v975, %v971
    %v1184 = vpack.c.b16 %v976, %v972
    %v1185 = vpack.c.b16 %v981, %v977
    %v1186 = vpack.c.b16 %v982, %v978
    %v1187 = vpack.c.b16 %v983, %v979
    %v1188 = vpack.c.b16 %v984, %v980
    %v1189 = vpack.c.b16 %v989, %v985
    %v1190 = vpack.c.b16 %v990, %v986
    %v1191 = vpack.c.b16 %v991, %v987
    %v1192 = vpack.c.b16 %v992, %v988
    %v1193 = vpack.c.b16 %v997, %v993
    %v1194 = vpack.c.b16 %v998, %v994
    %v1195 = vpack.c.b16 %v999, %v995
    %v1196 = vpack.c.b16 %v1000, %v996
    %vm1393 = vcmask 130048
    %v1395 = vsel %vm1393, %v194, 0
    %1397 = vmatprep.subr.bf16.mxu0 %v1030
    %1398 = vmatpush1.bf16.msra.mxu0 %v1029
    %1399 = vmatprep.subr.bf16.mxu0 %v1026
    %1400 = vmatpush1.bf16.msra.mxu0 %v1025
    %1401 = vmatprep.subr.bf16.mxu0 %v1022
    %1402 = vmatpush1.bf16.msra.mxu0 %v1021
    %1403 = vmatprep.subr.bf16.mxu0 %v1018
    %1404 = vmatpush1.bf16.msra.mxu0 %v1017
    %1405 = vmatprep.subr.bf16.mxu0 %v1014
    %1406 = vmatpush1.bf16.msra.mxu0 %v1013
    %1407 = vmatprep.subr.bf16.mxu0 %v1010
    %1408 = vmatpush1.bf16.msra.mxu0 %v1009
    %1409 = vmatprep.subr.bf16.mxu0 %v1006
    %1410 = vmatpush1.bf16.msra.mxu0 %v1005
    %1411 = vmatprep.subr.bf16.mxu0 %v1002
    %1412 = vmatpush1.bf16.msra.mxu0 %v1001
    %1413 = vmatprep.subr.bf16.mxu0 %v1062
    %1414 = vmatpush2.bf16.msra.mxu0 %v1061
    %1415 = vmatprep.subr.bf16.mxu0 %v1058
    %1416 = vmatpush2.bf16.msra.mxu0 %v1057
    %1417 = vmatprep.subr.bf16.mxu0 %v1054
    %1418 = vmatpush2.bf16.msra.mxu0 %v1053
    %1419 = vmatprep.subr.bf16.mxu0 %v1050
    %1420 = vmatpush2.bf16.msra.mxu0 %v1049
    %1421 = vmatprep.subr.bf16.mxu0 %v1046
    %1422 = vmatpush2.bf16.msra.mxu0 %v1045
    %1423 = vmatprep.subr.bf16.mxu0 %v1042
    %1424 = vmatpush2.bf16.msra.mxu0 %v1041
    %1425 = vmatprep.subr.bf16.mxu0 %v1038
    %1426 = vmatpush2.bf16.msra.mxu0 %v1037
    %1427 = vmatprep.subr.bf16.mxu0 %v1034
    %1428 = vmatpush2.bf16.msra.mxu0 %v1033
    %1429 = vmatprep.mubr.bf16.mxu0 %v189
    %1430 = vmatmul.mubr.bf16.gmra.mxu0 %v188
    %v1431 = vpop.f32.mrf.mxu0
    %v1432 = vadd.f32 %v396, %v1431
    %v1433 = vpop.f32.mrf.mxu0
    %v1434 = vadd.f32 %v400, %v1433
    %v1435 = vpop.f32.mrf.mxu0
    %v1436 = vpop.f32.mrf.mxu0
    %1437 = vdwg.mxu0
    %1438 = vmatprep.subr.bf16.mxu0 %v1094
    %1439 = vmatpush1.bf16.msra.mxu0 %v1093
    %1440 = vmatprep.subr.bf16.mxu0 %v1090
    %1441 = vmatpush1.bf16.msra.mxu0 %v1089
    %1442 = vmatprep.subr.bf16.mxu0 %v1086
    %1443 = vmatpush1.bf16.msra.mxu0 %v1085
    %1444 = vmatprep.subr.bf16.mxu0 %v1082
    %1445 = vmatpush1.bf16.msra.mxu0 %v1081
    %1446 = vmatprep.subr.bf16.mxu0 %v1078
    %1447 = vmatpush1.bf16.msra.mxu0 %v1077
    %1448 = vmatprep.subr.bf16.mxu0 %v1074
    %1449 = vmatpush1.bf16.msra.mxu0 %v1073
    %1450 = vmatprep.subr.bf16.mxu0 %v1070
    %1451 = vmatpush1.bf16.msra.mxu0 %v1069
    %1452 = vmatprep.subr.bf16.mxu0 %v1066
    %1453 = vmatpush1.bf16.msra.mxu0 %v1065
    %1454 = vmatprep.subr.bf16.mxu0 %v1126
    %1455 = vmatpush2.bf16.msra.mxu0 %v1125
    %1456 = vmatprep.subr.bf16.mxu0 %v1122
    %1457 = vmatpush2.bf16.msra.mxu0 %v1121
    %1458 = vmatprep.subr.bf16.mxu0 %v1118
    %1459 = vmatpush2.bf16.msra.mxu0 %v1117
    %1460 = vmatprep.subr.bf16.mxu0 %v1114
    %1461 = vmatpush2.bf16.msra.mxu0 %v1113
    %1462 = vmatprep.subr.bf16.mxu0 %v1110
    %1463 = vmatpush2.bf16.msra.mxu0 %v1109
    %1464 = vmatprep.subr.bf16.mxu0 %v1106
    %1465 = vmatpush2.bf16.msra.mxu0 %v1105
    %1466 = vmatprep.subr.bf16.mxu0 %v1102
    %1467 = vmatpush2.bf16.msra.mxu0 %v1101
    %1468 = vmatprep.subr.bf16.mxu0 %v1098
    %1469 = vmatpush2.bf16.msra.mxu0 %v1097
    %1470 = vmatprep.mubr.bf16.mxu0 %v191
    %1471 = vmatmul.mubr.bf16.gmra.mxu0 %v190
    %v1472 = vpop.f32.mrf.mxu0
    %v1473 = vadd.f32 %v1432, %v1472
    %v1474 = vpop.f32.mrf.mxu0
    %v1475 = vadd.f32 %v1434, %v1474
    %v1476 = vpop.f32.mrf.mxu0
    %v1477 = vpop.f32.mrf.mxu0
    %1478 = vdwg.mxu0
    %1479 = vmatprep.subr.bf16.mxu0 %v1158
    %1480 = vmatpush1.bf16.msra.mxu0 %v1157
    %1481 = vmatprep.subr.bf16.mxu0 %v1154
    %1482 = vmatpush1.bf16.msra.mxu0 %v1153
    %1483 = vmatprep.subr.bf16.mxu0 %v1150
    %1484 = vmatpush1.bf16.msra.mxu0 %v1149
    %1485 = vmatprep.subr.bf16.mxu0 %v1146
    %1486 = vmatpush1.bf16.msra.mxu0 %v1145
    %1487 = vmatprep.subr.bf16.mxu0 %v1142
    %1488 = vmatpush1.bf16.msra.mxu0 %v1141
    %1489 = vmatprep.subr.bf16.mxu0 %v1138
    %1490 = vmatpush1.bf16.msra.mxu0 %v1137
    %1491 = vmatprep.subr.bf16.mxu0 %v1134
    %1492 = vmatpush1.bf16.msra.mxu0 %v1133
    %1493 = vmatprep.subr.bf16.mxu0 %v1130
    %1494 = vmatpush1.bf16.msra.mxu0 %v1129
    %1495 = vmatprep.subr.bf16.mxu0 %v1190
    %1496 = vmatpush2.bf16.msra.mxu0 %v1189
    %1497 = vmatprep.subr.bf16.mxu0 %v1186
    %1498 = vmatpush2.bf16.msra.mxu0 %v1185
    %1499 = vmatprep.subr.bf16.mxu0 %v1182
    %1500 = vmatpush2.bf16.msra.mxu0 %v1181
    %1501 = vmatprep.subr.bf16.mxu0 %v1178
    %1502 = vmatpush2.bf16.msra.mxu0 %v1177
    %1503 = vmatprep.subr.bf16.mxu0 %v1174
    %1504 = vmatpush2.bf16.msra.mxu0 %v1173
    %1505 = vmatprep.subr.bf16.mxu0 %v1170
    %1506 = vmatpush2.bf16.msra.mxu0 %v1169
    %1507 = vmatprep.subr.bf16.mxu0 %v1166
    %1508 = vmatpush2.bf16.msra.mxu0 %v1165
    %1509 = vmatprep.subr.bf16.mxu0 %v1162
    %1510 = vmatpush2.bf16.msra.mxu0 %v1161
    %1511 = vmatprep.mubr.bf16.mxu0 %v193
    %1512 = vmatmul.mubr.bf16.gmra.mxu0 %v192
    %v1513 = vpop.f32.mrf.mxu0
    %v1514 = vadd.f32 %v1473, %v1513
    %v1515 = vpop.f32.mrf.mxu0
    %v1516 = vadd.f32 %v1475, %v1515
    %v1517 = vpop.f32.mrf.mxu0
    %v1518 = vpop.f32.mrf.mxu0
    %1519 = vdwg.mxu0
    %1520 = vmatprep.subr.bf16.mxu0 0
    %1521 = vmatpush1.bf16.msra.mxu0 0
    %1522 = vmatprep.subr.bf16.mxu0 0
    %1523 = vmatpush1.bf16.msra.mxu0 0
    %1524 = vmatprep.subr.bf16.mxu0 0
    %1525 = vmatpush1.bf16.msra.mxu0 0
    %1526 = vmatprep.subr.bf16.mxu0 0
    %1527 = vmatpush1.bf16.msra.mxu0 0
    %1528 = vmatprep.subr.bf16.mxu0 0
    %1529 = vmatpush1.bf16.msra.mxu0 0
    %1530 = vmatprep.subr.bf16.mxu0 0
    %1531 = vmatpush1.bf16.msra.mxu0 0
    %1532 = vmatprep.subr.bf16.mxu0 0
    %1533 = vmatpush1.bf16.msra.mxu0 0
    %1534 = vmatprep.subr.bf16.mxu0 %v1194
    %1535 = vmatpush1.bf16.msra.mxu0 %v1193
    %1536 = vmatprep.subr.bf16.mxu0 0
    %1537 = vmatpush2.bf16.msra.mxu0 0
    %1538 = vmatprep.subr.bf16.mxu0 0
    %1539 = vmatpush2.bf16.msra.mxu0 0
    %1540 = vmatprep.subr.bf16.mxu0 0
    %1541 = vmatpush2.bf16.msra.mxu0 0
    %1542 = vmatprep.subr.bf16.mxu0 0
    %1543 = vmatpush2.bf16.msra.mxu0 0
    %1544 = vmatprep.subr.bf16.mxu0 0
    %1545 = vmatpush2.bf16.msra.mxu0 0
    %1546 = vmatprep.subr.bf16.mxu0 0
    %1547 = vmatpush2.bf16.msra.mxu0 0
    %1548 = vmatprep.subr.bf16.mxu0 0
    %1549 = vmatpush2.bf16.msra.mxu0 0
    %1550 = vmatprep.subr.bf16.mxu0 0
    %1551 = vmatpush2.bf16.msra.mxu0 0
    %1552 = vmatprep.mubr.bf16.mxu0 0
    %1553 = vmatmul.mubr.bf16.gmra.mxu0 %v1395
    %v1554 = vpop.f32.mrf.mxu0
    %v1555 = vadd.f32 %v1514, %v1554
    %v1556 = vpop.f32.mrf.mxu0
    %v1557 = vadd.f32 %v1516, %v1556
    %v1558 = vpop.f32.mrf.mxu0
    %v1559 = vpop.f32.mrf.mxu0
    %1560 = vdwg.mxu0
    %1561 = vmatprep.subr.bf16.mxu0 %v1032
    %1562 = vmatpush1.bf16.msra.mxu0 %v1031
    %1563 = vmatprep.subr.bf16.mxu0 %v1028
    %1564 = vmatpush1.bf16.msra.mxu0 %v1027
    %1565 = vmatprep.subr.bf16.mxu0 %v1024
    %1566 = vmatpush1.bf16.msra.mxu0 %v1023
    %1567 = vmatprep.subr.bf16.mxu0 %v1020
    %1568 = vmatpush1.bf16.msra.mxu0 %v1019
    %1569 = vmatprep.subr.bf16.mxu0 %v1016
    %1570 = vmatpush1.bf16.msra.mxu0 %v1015
    %1571 = vmatprep.subr.bf16.mxu0 %v1012
    %1572 = vmatpush1.bf16.msra.mxu0 %v1011
    %1573 = vmatprep.subr.bf16.mxu0 %v1008
    %1574 = vmatpush1.bf16.msra.mxu0 %v1007
    %1575 = vmatprep.subr.bf16.mxu0 %v1004
    %1576 = vmatpush1.bf16.msra.mxu0 %v1003
    %1577 = vmatprep.subr.bf16.mxu0 %v1064
    %1578 = vmatpush2.bf16.msra.mxu0 %v1063
    %1579 = vmatprep.subr.bf16.mxu0 %v1060
    %1580 = vmatpush2.bf16.msra.mxu0 %v1059
    %1581 = vmatprep.subr.bf16.mxu0 %v1056
    %1582 = vmatpush2.bf16.msra.mxu0 %v1055
    %1583 = vmatprep.subr.bf16.mxu0 %v1052
    %1584 = vmatpush2.bf16.msra.mxu0 %v1051
    %1585 = vmatprep.subr.bf16.mxu0 %v1048
    %1586 = vmatpush2.bf16.msra.mxu0 %v1047
    %1587 = vmatprep.subr.bf16.mxu0 %v1044
    %1588 = vmatpush2.bf16.msra.mxu0 %v1043
    %1589 = vmatprep.subr.bf16.mxu0 %v1040
    %1590 = vmatpush2.bf16.msra.mxu0 %v1039
    %1591 = vmatprep.subr.bf16.mxu0 %v1036
    %1592 = vmatpush2.bf16.msra.mxu0 %v1035
    %1593 = vmatprep.mubr.bf16.mxu0 %v189
    %1594 = vmatmul.mubr.bf16.gmra.mxu0 %v188
    %v1595 = vpop.f32.mrf.mxu0
    %v1596 = vadd.f32 %v404, %v1595
    %v1597 = vpop.f32.mrf.mxu0
    %v1598 = vadd.f32 %v408, %v1597
    %v1599 = vpop.f32.mrf.mxu0
    %v1600 = vpop.f32.mrf.mxu0
    %1601 = vdwg.mxu0
    %1602 = vmatprep.subr.bf16.mxu0 %v1096
    %1603 = vmatpush1.bf16.msra.mxu0 %v1095
    %1604 = vmatprep.subr.bf16.mxu0 %v1092
    %1605 = vmatpush1.bf16.msra.mxu0 %v1091
    %1606 = vmatprep.subr.bf16.mxu0 %v1088
    %1607 = vmatpush1.bf16.msra.mxu0 %v1087
    %1608 = vmatprep.subr.bf16.mxu0 %v1084
    %1609 = vmatpush1.bf16.msra.mxu0 %v1083
    %1610 = vmatprep.subr.bf16.mxu0 %v1080
    %1611 = vmatpush1.bf16.msra.mxu0 %v1079
    %1612 = vmatprep.subr.bf16.mxu0 %v1076
    %1613 = vmatpush1.bf16.msra.mxu0 %v1075
    %1614 = vmatprep.subr.bf16.mxu0 %v1072
    %1615 = vmatpush1.bf16.msra.mxu0 %v1071
    %1616 = vmatprep.subr.bf16.mxu0 %v1068
    %1617 = vmatpush1.bf16.msra.mxu0 %v1067
    %1618 = vmatprep.subr.bf16.mxu0 %v1128
    %1619 = vmatpush2.bf16.msra.mxu0 %v1127
    %1620 = vmatprep.subr.bf16.mxu0 %v1124
    %1621 = vmatpush2.bf16.msra.mxu0 %v1123
    %1622 = vmatprep.subr.bf16.mxu0 %v1120
    %1623 = vmatpush2.bf16.msra.mxu0 %v1119
    %1624 = vmatprep.subr.bf16.mxu0 %v1116
    %1625 = vmatpush2.bf16.msra.mxu0 %v1115
    %1626 = vmatprep.subr.bf16.mxu0 %v1112
    %1627 = vmatpush2.bf16.msra.mxu0 %v1111
    %1628 = vmatprep.subr.bf16.mxu0 %v1108
    %1629 = vmatpush2.bf16.msra.mxu0 %v1107
    %1630 = vmatprep.subr.bf16.mxu0 %v1104
    %1631 = vmatpush2.bf16.msra.mxu0 %v1103
    %1632 = vmatprep.subr.bf16.mxu0 %v1100
    %1633 = vmatpush2.bf16.msra.mxu0 %v1099
    %1634 = vmatprep.mubr.bf16.mxu0 %v191
    %1635 = vmatmul.mubr.bf16.gmra.mxu0 %v190
    %v1636 = vpop.f32.mrf.mxu0
    %v1637 = vadd.f32 %v1596, %v1636
    %v1638 = vpop.f32.mrf.mxu0
    %v1639 = vadd.f32 %v1598, %v1638
    %v1640 = vpop.f32.mrf.mxu0
    %v1641 = vpop.f32.mrf.mxu0
    %1642 = vdwg.mxu0
    %1643 = vmatprep.subr.bf16.mxu0 %v1160
    %1644 = vmatpush1.bf16.msra.mxu0 %v1159
    %1645 = vmatprep.subr.bf16.mxu0 %v1156
    %1646 = vmatpush1.bf16.msra.mxu0 %v1155
    %1647 = vmatprep.subr.bf16.mxu0 %v1152
    %1648 = vmatpush1.bf16.msra.mxu0 %v1151
    %1649 = vmatprep.subr.bf16.mxu0 %v1148
    %1650 = vmatpush1.bf16.msra.mxu0 %v1147
    %1651 = vmatprep.subr.bf16.mxu0 %v1144
    %1652 = vmatpush1.bf16.msra.mxu0 %v1143
    %1653 = vmatprep.subr.bf16.mxu0 %v1140
    %1654 = vmatpush1.bf16.msra.mxu0 %v1139
    %1655 = vmatprep.subr.bf16.mxu0 %v1136
    %1656 = vmatpush1.bf16.msra.mxu0 %v1135
    %1657 = vmatprep.subr.bf16.mxu0 %v1132
    %1658 = vmatpush1.bf16.msra.mxu0 %v1131
    %1659 = vmatprep.subr.bf16.mxu0 %v1192
    %1660 = vmatpush2.bf16.msra.mxu0 %v1191
    %1661 = vmatprep.subr.bf16.mxu0 %v1188
    %1662 = vmatpush2.bf16.msra.mxu0 %v1187
    %1663 = vmatprep.subr.bf16.mxu0 %v1184
    %1664 = vmatpush2.bf16.msra.mxu0 %v1183
    %1665 = vmatprep.subr.bf16.mxu0 %v1180
    %1666 = vmatpush2.bf16.msra.mxu0 %v1179
    %1667 = vmatprep.subr.bf16.mxu0 %v1176
    %1668 = vmatpush2.bf16.msra.mxu0 %v1175
    %1669 = vmatprep.subr.bf16.mxu0 %v1172
    %1670 = vmatpush2.bf16.msra.mxu0 %v1171
    %1671 = vmatprep.subr.bf16.mxu0 %v1168
    %1672 = vmatpush2.bf16.msra.mxu0 %v1167
    %1673 = vmatprep.subr.bf16.mxu0 %v1164
    %1674 = vmatpush2.bf16.msra.mxu0 %v1163
    %1675 = vmatprep.mubr.bf16.mxu0 %v193
    %1676 = vmatmul.mubr.bf16.gmra.mxu0 %v192
    %v1677 = vpop.f32.mrf.mxu0
    %v1678 = vadd.f32 %v1637, %v1677
    %v1679 = vpop.f32.mrf.mxu0
    %v1680 = vadd.f32 %v1639, %v1679
    %v1681 = vpop.f32.mrf.mxu0
    %v1682 = vpop.f32.mrf.mxu0
    %1683 = vdwg.mxu0
    %1684 = vmatprep.subr.bf16.mxu0 0
    %1685 = vmatpush1.bf16.msra.mxu0 0
    %1686 = vmatprep.subr.bf16.mxu0 0
    %1687 = vmatpush1.bf16.msra.mxu0 0
    %1688 = vmatprep.subr.bf16.mxu0 0
    %1689 = vmatpush1.bf16.msra.mxu0 0
    %1690 = vmatprep.subr.bf16.mxu0 0
    %1691 = vmatpush1.bf16.msra.mxu0 0
    %1692 = vmatprep.subr.bf16.mxu0 0
    %1693 = vmatpush1.bf16.msra.mxu0 0
    %1694 = vmatprep.subr.bf16.mxu0 0
    %1695 = vmatpush1.bf16.msra.mxu0 0
    %1696 = vmatprep.subr.bf16.mxu0 0
    %1697 = vmatpush1.bf16.msra.mxu0 0
    %1698 = vmatprep.subr.bf16.mxu0 %v1196
    %1699 = vmatpush1.bf16.msra.mxu0 %v1195
    %1700 = vmatprep.subr.bf16.mxu0 0
    %1701 = vmatpush2.bf16.msra.mxu0 0
    %1702 = vmatprep.subr.bf16.mxu0 0
    %1703 = vmatpush2.bf16.msra.mxu0 0
    %1704 = vmatprep.subr.bf16.mxu0 0
    %1705 = vmatpush2.bf16.msra.mxu0 0
    %1706 = vmatprep.subr.bf16.mxu0 0
    %1707 = vmatpush2.bf16.msra.mxu0 0
    %1708 = vmatprep.subr.bf16.mxu0 0
    %1709 = vmatpush2.bf16.msra.mxu0 0
    %1710 = vmatprep.subr.bf16.mxu0 0
    %1711 = vmatpush2.bf16.msra.mxu0 0
    %1712 = vmatprep.subr.bf16.mxu0 0
    %1713 = vmatpush2.bf16.msra.mxu0 0
    %1714 = vmatprep.subr.bf16.mxu0 0
    %1715 = vmatpush2.bf16.msra.mxu0 0
    %1716 = vmatprep.mubr.bf16.mxu0 0
    %1717 = vmatmul.mubr.bf16.gmra.mxu0 %v1395
    %v1718 = vpop.f32.mrf.mxu0
    %v1719 = vadd.f32 %v1678, %v1718
    %v1720 = vpop.f32.mrf.mxu0
    %v1721 = vadd.f32 %v1680, %v1720
    %v1722 = vpop.f32.mrf.mxu0
    %v1723 = vpop.f32.mrf.mxu0
    %1724 = vdwg.mxu0
    %v1725 = vmax.f32 %v1555, 0.0
    %v1726 = vmax.f32 %v1557, 0.0
    %v1727 = vmax.f32 %v1719, 0.0
    %v1728 = vmax.f32 %v1721, 0.0
    %v1729 = vpack.c.bf16 %v1725, %v1725
    %v1730 = vpack.c.bf16 %v1726, %v1726
    %v1731 = vpack.c.bf16 %v1727, %v1727
    %v1732 = vpack.c.bf16 %v1728, %v1728
    %v1733 = vld [vmem:[#allocation8] sm:$0xff]
    %v1734 = vld [vmem:[#allocation8 + $0x8] sm:$0xff]
    %v1735 = vld [vmem:[#allocation8 + $0x10] sm:$0xff]
    %v1736 = vld [vmem:[#allocation8 + $0x18] sm:$0xff]
    %v1737 = vld [vmem:[#allocation8 + $0x20] sm:$0xff]
    %v1738 = vld [vmem:[#allocation8 + $0x28] sm:$0xff]
    %v1739 = vld [vmem:[#allocation8 + $0x30] sm:$0xff]
    %v1740 = vld [vmem:[#allocation8 + $0x38] sm:$0xff]
    %v1741 = vld [vmem:[#allocation8 + $0x40] sm:$0xff]
    %v1742 = vld [vmem:[#allocation8 + $0x48] sm:$0xff]
    %v1743 = vld [vmem:[#allocation8 + $0x50] sm:$0xff]
    %v1744 = vld [vmem:[#allocation8 + $0x58] sm:$0xff]
    %v1745 = vld [vmem:[#allocation8 + $0x60] sm:$0xff]
    %v1746 = vld [vmem:[#allocation8 + $0x68] sm:$0xff]
    %v1747 = vld [vmem:[#allocation8 + $0x70] sm:$0xff]
    %v1748 = vld [vmem:[#allocation8 + $0x78] sm:$0xff]
    %v1749 = vld [vmem:[#allocation8 + $0x80] sm:$0xff]
    %v1750 = vld [vmem:[#allocation8 + $0x88] sm:$0xff]
    %v1751 = vld [vmem:[#allocation8 + $0x90] sm:$0xff]
    %v1752 = vld [vmem:[#allocation8 + $0x98] sm:$0xff]
    %v1753 = vld [vmem:[#allocation8 + $0xa0] sm:$0xff]
    %v1754 = vld [vmem:[#allocation8 + $0xa8] sm:$0xff]
    %v1755 = vld [vmem:[#allocation8 + $0xb0] sm:$0xff]
    %v1756 = vld [vmem:[#allocation8 + $0xb8] sm:$0xff]
    %v1757 = vld [vmem:[#allocation8 + $0xc0] sm:$0xff]
    %v1758 = vld [vmem:[#allocation8 + $0xc8] sm:$0xff]
    %v1759 = vld [vmem:[#allocation8 + $0xd0] sm:$0xff]
    %v1760 = vld [vmem:[#allocation8 + $0xd8] sm:$0xff]
    %v1761 = vld [vmem:[#allocation8 + $0xe0] sm:$0xff]
    %v1762 = vld [vmem:[#allocation8 + $0xe8] sm:$0xff]
    %v1763 = vld [vmem:[#allocation8 + $0xf0] sm:$0xff]
    %v1764 = vld [vmem:[#allocation8 + $0xf8] sm:$0xff]
    %v1765 = vld [vmem:[#allocation8 + $0x100] sm:$0xff]
    %v1766 = vld [vmem:[#allocation8 + $0x108] sm:$0xff]
    %v1767 = vld [vmem:[#allocation8 + $0x110] sm:$0xff]
    %v1768 = vld [vmem:[#allocation8 + $0x118] sm:$0xff]
    %v1769 = vld [vmem:[#allocation8 + $0x120] sm:$0xff]
    %v1770 = vld [vmem:[#allocation8 + $0x128] sm:$0xff]
    %v1771 = vld [vmem:[#allocation8 + $0x130] sm:$0xff]
    %v1772 = vld [vmem:[#allocation8 + $0x138] sm:$0xff]
    %v1773 = vld [vmem:[#allocation8 + $0x140] sm:$0xff]
    %v1774 = vld [vmem:[#allocation8 + $0x148] sm:$0xff]
    %v1775 = vld [vmem:[#allocation8 + $0x150] sm:$0xff]
    %v1776 = vld [vmem:[#allocation8 + $0x158] sm:$0xff]
    %v1777 = vld [vmem:[#allocation8 + $0x160] sm:$0xff]
    %v1778 = vld [vmem:[#allocation8 + $0x168] sm:$0xff]
    %v1779 = vld [vmem:[#allocation8 + $0x170] sm:$0xff]
    %v1780 = vld [vmem:[#allocation8 + $0x178] sm:$0xff]
    %v1781 = vld [vmem:[#allocation8 + $0x180] sm:$0xff]
    %v1782 = vld [vmem:[#allocation8 + $0x188] sm:$0xff]
    %v1783 = vld [vmem:[#allocation8 + $0x190] sm:$0xff]
    %v1784 = vld [vmem:[#allocation8 + $0x198] sm:$0xff]
    %v1785 = vld [vmem:[#allocation8 + $0x1a0] sm:$0xff]
    %v1786 = vld [vmem:[#allocation8 + $0x1a8] sm:$0xff]
    %v1787 = vld [vmem:[#allocation8 + $0x1b0] sm:$0xff]
    %v1788 = vld [vmem:[#allocation8 + $0x1b8] sm:$0xff]
    %v1789 = vld [vmem:[#allocation8 + $0x1c0] sm:$0xff]
    %v1790 = vld [vmem:[#allocation8 + $0x1c8] sm:$0xff]
    %v1791 = vld [vmem:[#allocation8 + $0x1d0] sm:$0xff]
    %v1792 = vld [vmem:[#allocation8 + $0x1d8] sm:$0xff]
    %v1793 = vld [vmem:[#allocation8 + $0x1e0] sm:$0xff]
    %v1794 = vld [vmem:[#allocation8 + $0x1e8] sm:$0xff]
    %v1795 = vld [vmem:[#allocation8 + $0x1f0] sm:$0xff]
    %v1796 = vld [vmem:[#allocation8 + $0x1f8] sm:$0xff]
    %v1797 = vld [vmem:[#allocation8 + $0x200] sm:$0xff]
    %v1798 = vld [vmem:[#allocation8 + $0x208] sm:$0xff]
    %v1799 = vld [vmem:[#allocation8 + $0x210] sm:$0xff]
    %v1800 = vld [vmem:[#allocation8 + $0x218] sm:$0xff]
    %v1801 = vld [vmem:[#allocation8 + $0x220] sm:$0xff]
    %v1802 = vld [vmem:[#allocation8 + $0x228] sm:$0xff]
    %v1803 = vld [vmem:[#allocation8 + $0x230] sm:$0xff]
    %v1804 = vld [vmem:[#allocation8 + $0x238] sm:$0xff]
    %v1805 = vld [vmem:[#allocation8 + $0x240] sm:$0xff]
    %v1806 = vld [vmem:[#allocation8 + $0x248] sm:$0xff]
    %v1807 = vld [vmem:[#allocation8 + $0x250] sm:$0xff]
    %v1808 = vld [vmem:[#allocation8 + $0x258] sm:$0xff]
    %v1809 = vld [vmem:[#allocation8 + $0x260] sm:$0xff]
    %v1810 = vld [vmem:[#allocation8 + $0x268] sm:$0xff]
    %v1811 = vld [vmem:[#allocation8 + $0x270] sm:$0xff]
    %v1812 = vld [vmem:[#allocation8 + $0x278] sm:$0xff]
    %v1813 = vld [vmem:[#allocation8 + $0x280] sm:$0xff]
    %v1814 = vld [vmem:[#allocation8 + $0x288] sm:$0xff]
    %v1815 = vld [vmem:[#allocation8 + $0x290] sm:$0xff]
    %v1816 = vld [vmem:[#allocation8 + $0x298] sm:$0xff]
    %v1817 = vld [vmem:[#allocation8 + $0x2a0] sm:$0xff]
    %v1818 = vld [vmem:[#allocation8 + $0x2a8] sm:$0xff]
    %v1819 = vld [vmem:[#allocation8 + $0x2b0] sm:$0xff]
    %v1820 = vld [vmem:[#allocation8 + $0x2b8] sm:$0xff]
    %v1821 = vld [vmem:[#allocation8 + $0x2c0] sm:$0xff]
    %v1822 = vld [vmem:[#allocation8 + $0x2c8] sm:$0xff]
    %v1823 = vld [vmem:[#allocation8 + $0x2d0] sm:$0xff]
    %v1824 = vld [vmem:[#allocation8 + $0x2d8] sm:$0xff]
    %v1825 = vld [vmem:[#allocation8 + $0x2e0] sm:$0xff]
    %v1826 = vld [vmem:[#allocation8 + $0x2e8] sm:$0xff]
    %v1827 = vld [vmem:[#allocation8 + $0x2f0] sm:$0xff]
    %v1828 = vld [vmem:[#allocation8 + $0x2f8] sm:$0xff]
    %v1829 = vld [vmem:[#allocation8 + $0x300] sm:$0xff]
    %v1830 = vld [vmem:[#allocation8 + $0x308] sm:$0xff]
    %v1831 = vld [vmem:[#allocation8 + $0x310] sm:$0xff]
    %v1832 = vld [vmem:[#allocation8 + $0x318] sm:$0xff]
    %v1833 = vld [vmem:[#allocation8 + $0x320] sm:$0xff]
    %v1834 = vld [vmem:[#allocation8 + $0x328] sm:$0xff]
    %v1835 = vld [vmem:[#allocation8 + $0x330] sm:$0xff]
    %v1836 = vld [vmem:[#allocation8 + $0x338] sm:$0xff]
    %v1837 = vld [vmem:[#allocation8 + $0x340] sm:$0xff]
    %v1838 = vld [vmem:[#allocation8 + $0x348] sm:$0xff]
    %v1839 = vld [vmem:[#allocation8 + $0x350] sm:$0xff]
    %v1840 = vld [vmem:[#allocation8 + $0x358] sm:$0xff]
    %v1841 = vld [vmem:[#allocation8 + $0x360] sm:$0xff]
    %v1842 = vld [vmem:[#allocation8 + $0x368] sm:$0xff]
    %v1843 = vld [vmem:[#allocation8 + $0x370] sm:$0xff]
    %v1844 = vld [vmem:[#allocation8 + $0x378] sm:$0xff]
    %v1845 = vld [vmem:[#allocation8 + $0x380] sm:$0xff]
    %v1846 = vld [vmem:[#allocation8 + $0x388] sm:$0xff]
    %v1847 = vld [vmem:[#allocation8 + $0x390] sm:$0xff]
    %v1848 = vld [vmem:[#allocation8 + $0x398] sm:$0xff]
    %v1849 = vld [vmem:[#allocation8 + $0x3a0] sm:$0xff]
    %v1850 = vld [vmem:[#allocation8 + $0x3a8] sm:$0xff]
    %v1851 = vld [vmem:[#allocation8 + $0x3b0] sm:$0xff]
    %v1852 = vld [vmem:[#allocation8 + $0x3b8] sm:$0xff]
    %v1853 = vld [vmem:[#allocation8 + $0x3c0] sm:$0xff]
    %v1854 = vld [vmem:[#allocation8 + $0x3c8] sm:$0xff]
    %v1855 = vld [vmem:[#allocation8 + $0x3d0] sm:$0xff]
    %v1856 = vld [vmem:[#allocation8 + $0x3d8] sm:$0xff]
    %v1857 = vld [vmem:[#allocation8 + $0x3e0] sm:$0xff]
    %v1858 = vld [vmem:[#allocation8 + $0x3e8] sm:$0xff]
    %v1859 = vld [vmem:[#allocation8 + $0x3f0] sm:$0xff]
    %v1860 = vld [vmem:[#allocation8 + $0x3f8] sm:$0xff]
    %v1861 = vld [vmem:[%s4] sm:$0xf]
    %v1863 = vlaneseq
    %v1864 = vshrl.u32 %v1863, 7
    %v1865 = vsub.s32 0, %v1864
    %v1866 = vrot.slane %v1861, %v1865
    %v1867 = vlaneseq
    %v1868 = vshrl.u32 %v1867, 7
    %v1869 = vsub.s32 1, %v1868
    %v1870 = vrot.slane %v1861, %v1869
    %v1871 = vlaneseq
    %v1872 = vshrl.u32 %v1871, 7
    %v1873 = vsub.s32 2, %v1872
    %v1874 = vrot.slane %v1861, %v1873
    %v1875 = vlaneseq
    %v1876 = vshrl.u32 %v1875, 7
    %v1877 = vsub.s32 3, %v1876
    %v1878 = vrot.slane %v1861, %v1877
    %v2011 = vunpack.c.l.b16 %v1733
    %v2012 = vunpack.c.h.b16 %v1733
    %v2013 = vunpack.c.l.b16 %v1734
    %v2014 = vunpack.c.h.b16 %v1734
    %v2015 = vunpack.c.l.b16 %v1735
    %v2016 = vunpack.c.h.b16 %v1735
    %v2017 = vunpack.c.l.b16 %v1736
    %v2018 = vunpack.c.h.b16 %v1736
    %v2019 = vunpack.c.l.b16 %v1737
    %v2020 = vunpack.c.h.b16 %v1737
    %v2021 = vunpack.c.l.b16 %v1738
    %v2022 = vunpack.c.h.b16 %v1738
    %v2023 = vunpack.c.l.b16 %v1739
    %v2024 = vunpack.c.h.b16 %v1739
    %v2025 = vunpack.c.l.b16 %v1740
    %v2026 = vunpack.c.h.b16 %v1740
    %v2027 = vunpack.c.l.b16 %v1741
    %v2028 = vunpack.c.h.b16 %v1741
    %v2029 = vunpack.c.l.b16 %v1742
    %v2030 = vunpack.c.h.b16 %v1742
    %v2031 = vunpack.c.l.b16 %v1743
    %v2032 = vunpack.c.h.b16 %v1743
    %v2033 = vunpack.c.l.b16 %v1744
    %v2034 = vunpack.c.h.b16 %v1744
    %v2035 = vunpack.c.l.b16 %v1745
    %v2036 = vunpack.c.h.b16 %v1745
    %v2037 = vunpack.c.l.b16 %v1746
    %v2038 = vunpack.c.h.b16 %v1746
    %v2039 = vunpack.c.l.b16 %v1747
    %v2040 = vunpack.c.h.b16 %v1747
    %v2041 = vunpack.c.l.b16 %v1748
    %v2042 = vunpack.c.h.b16 %v1748
    %v2043 = vunpack.c.l.b16 %v1749
    %v2044 = vunpack.c.h.b16 %v1749
    %v2045 = vunpack.c.l.b16 %v1750
    %v2046 = vunpack.c.h.b16 %v1750
    %v2047 = vunpack.c.l.b16 %v1751
    %v2048 = vunpack.c.h.b16 %v1751
    %v2049 = vunpack.c.l.b16 %v1752
    %v2050 = vunpack.c.h.b16 %v1752
    %v2051 = vunpack.c.l.b16 %v1753
    %v2052 = vunpack.c.h.b16 %v1753
    %v2053 = vunpack.c.l.b16 %v1754
    %v2054 = vunpack.c.h.b16 %v1754
    %v2055 = vunpack.c.l.b16 %v1755
    %v2056 = vunpack.c.h.b16 %v1755
    %v2057 = vunpack.c.l.b16 %v1756
    %v2058 = vunpack.c.h.b16 %v1756
    %v2059 = vunpack.c.l.b16 %v1757
    %v2060 = vunpack.c.h.b16 %v1757
    %v2061 = vunpack.c.l.b16 %v1758
    %v2062 = vunpack.c.h.b16 %v1758
    %v2063 = vunpack.c.l.b16 %v1759
    %v2064 = vunpack.c.h.b16 %v1759
    %v2065 = vunpack.c.l.b16 %v1760
    %v2066 = vunpack.c.h.b16 %v1760
    %v2067 = vunpack.c.l.b16 %v1761
    %v2068 = vunpack.c.h.b16 %v1761
    %v2069 = vunpack.c.l.b16 %v1762
    %v2070 = vunpack.c.h.b16 %v1762
    %v2071 = vunpack.c.l.b16 %v1763
    %v2072 = vunpack.c.h.b16 %v1763
    %v2073 = vunpack.c.l.b16 %v1764
    %v2074 = vunpack.c.h.b16 %v1764
    %v2075 = vunpack.c.l.b16 %v1765
    %v2076 = vunpack.c.h.b16 %v1765
    %v2077 = vunpack.c.l.b16 %v1766
    %v2078 = vunpack.c.h.b16 %v1766
    %v2079 = vunpack.c.l.b16 %v1767
    %v2080 = vunpack.c.h.b16 %v1767
    %v2081 = vunpack.c.l.b16 %v1768
    %v2082 = vunpack.c.h.b16 %v1768
    %v2083 = vunpack.c.l.b16 %v1769
    %v2084 = vunpack.c.h.b16 %v1769
    %v2085 = vunpack.c.l.b16 %v1770
    %v2086 = vunpack.c.h.b16 %v1770
    %v2087 = vunpack.c.l.b16 %v1771
    %v2088 = vunpack.c.h.b16 %v1771
    %v2089 = vunpack.c.l.b16 %v1772
    %v2090 = vunpack.c.h.b16 %v1772
    %v2091 = vunpack.c.l.b16 %v1773
    %v2092 = vunpack.c.h.b16 %v1773
    %v2093 = vunpack.c.l.b16 %v1774
    %v2094 = vunpack.c.h.b16 %v1774
    %v2095 = vunpack.c.l.b16 %v1775
    %v2096 = vunpack.c.h.b16 %v1775
    %v2097 = vunpack.c.l.b16 %v1776
    %v2098 = vunpack.c.h.b16 %v1776
    %v2099 = vunpack.c.l.b16 %v1777
    %v2100 = vunpack.c.h.b16 %v1777
    %v2101 = vunpack.c.l.b16 %v1778
    %v2102 = vunpack.c.h.b16 %v1778
    %v2103 = vunpack.c.l.b16 %v1779
    %v2104 = vunpack.c.h.b16 %v1779
    %v2105 = vunpack.c.l.b16 %v1780
    %v2106 = vunpack.c.h.b16 %v1780
    %v2107 = vunpack.c.l.b16 %v1781
    %v2108 = vunpack.c.h.b16 %v1781
    %v2109 = vunpack.c.l.b16 %v1782
    %v2110 = vunpack.c.h.b16 %v1782
    %v2111 = vunpack.c.l.b16 %v1783
    %v2112 = vunpack.c.h.b16 %v1783
    %v2113 = vunpack.c.l.b16 %v1784
    %v2114 = vunpack.c.h.b16 %v1784
    %v2115 = vunpack.c.l.b16 %v1785
    %v2116 = vunpack.c.h.b16 %v1785
    %v2117 = vunpack.c.l.b16 %v1786
    %v2118 = vunpack.c.h.b16 %v1786
    %v2119 = vunpack.c.l.b16 %v1787
    %v2120 = vunpack.c.h.b16 %v1787
    %v2121 = vunpack.c.l.b16 %v1788
    %v2122 = vunpack.c.h.b16 %v1788
    %v2123 = vunpack.c.l.b16 %v1789
    %v2124 = vunpack.c.h.b16 %v1789
    %v2125 = vunpack.c.l.b16 %v1790
    %v2126 = vunpack.c.h.b16 %v1790
    %v2127 = vunpack.c.l.b16 %v1791
    %v2128 = vunpack.c.h.b16 %v1791
    %v2129 = vunpack.c.l.b16 %v1792
    %v2130 = vunpack.c.h.b16 %v1792
    %v2131 = vunpack.c.l.b16 %v1793
    %v2132 = vunpack.c.h.b16 %v1793
    %v2133 = vunpack.c.l.b16 %v1794
    %v2134 = vunpack.c.h.b16 %v1794
    %v2135 = vunpack.c.l.b16 %v1795
    %v2136 = vunpack.c.h.b16 %v1795
    %v2137 = vunpack.c.l.b16 %v1796
    %v2138 = vunpack.c.h.b16 %v1796
    %v2139 = vunpack.c.l.b16 %v1797
    %v2140 = vunpack.c.h.b16 %v1797
    %v2141 = vunpack.c.l.b16 %v1798
    %v2142 = vunpack.c.h.b16 %v1798
    %v2143 = vunpack.c.l.b16 %v1799
    %v2144 = vunpack.c.h.b16 %v1799
    %v2145 = vunpack.c.l.b16 %v1800
    %v2146 = vunpack.c.h.b16 %v1800
    %v2147 = vunpack.c.l.b16 %v1801
    %v2148 = vunpack.c.h.b16 %v1801
    %v2149 = vunpack.c.l.b16 %v1802
    %v2150 = vunpack.c.h.b16 %v1802
    %v2151 = vunpack.c.l.b16 %v1803
    %v2152 = vunpack.c.h.b16 %v1803
    %v2153 = vunpack.c.l.b16 %v1804
    %v2154 = vunpack.c.h.b16 %v1804
    %v2155 = vunpack.c.l.b16 %v1805
    %v2156 = vunpack.c.h.b16 %v1805
    %v2157 = vunpack.c.l.b16 %v1806
    %v2158 = vunpack.c.h.b16 %v1806
    %v2159 = vunpack.c.l.b16 %v1807
    %v2160 = vunpack.c.h.b16 %v1807
    %v2161 = vunpack.c.l.b16 %v1808
    %v2162 = vunpack.c.h.b16 %v1808
    %v2163 = vunpack.c.l.b16 %v1809
    %v2164 = vunpack.c.h.b16 %v1809
    %v2165 = vunpack.c.l.b16 %v1810
    %v2166 = vunpack.c.h.b16 %v1810
    %v2167 = vunpack.c.l.b16 %v1811
    %v2168 = vunpack.c.h.b16 %v1811
    %v2169 = vunpack.c.l.b16 %v1812
    %v2170 = vunpack.c.h.b16 %v1812
    %v2171 = vunpack.c.l.b16 %v1813
    %v2172 = vunpack.c.h.b16 %v1813
    %v2173 = vunpack.c.l.b16 %v1814
    %v2174 = vunpack.c.h.b16 %v1814
    %v2175 = vunpack.c.l.b16 %v1815
    %v2176 = vunpack.c.h.b16 %v1815
    %v2177 = vunpack.c.l.b16 %v1816
    %v2178 = vunpack.c.h.b16 %v1816
    %v2179 = vunpack.c.l.b16 %v1817
    %v2180 = vunpack.c.h.b16 %v1817
    %v2181 = vunpack.c.l.b16 %v1818
    %v2182 = vunpack.c.h.b16 %v1818
    %v2183 = vunpack.c.l.b16 %v1819
    %v2184 = vunpack.c.h.b16 %v1819
    %v2185 = vunpack.c.l.b16 %v1820
    %v2186 = vunpack.c.h.b16 %v1820
    %v2187 = vunpack.c.l.b16 %v1821
    %v2188 = vunpack.c.h.b16 %v1821
    %v2189 = vunpack.c.l.b16 %v1822
    %v2190 = vunpack.c.h.b16 %v1822
    %v2191 = vunpack.c.l.b16 %v1823
    %v2192 = vunpack.c.h.b16 %v1823
    %v2193 = vunpack.c.l.b16 %v1824
    %v2194 = vunpack.c.h.b16 %v1824
    %v2195 = vunpack.c.l.b16 %v1825
    %v2196 = vunpack.c.h.b16 %v1825
    %v2197 = vunpack.c.l.b16 %v1826
    %v2198 = vunpack.c.h.b16 %v1826
    %v2199 = vunpack.c.l.b16 %v1827
    %v2200 = vunpack.c.h.b16 %v1827
    %v2201 = vunpack.c.l.b16 %v1828
    %v2202 = vunpack.c.h.b16 %v1828
    %v2203 = vunpack.c.l.b16 %v1829
    %v2204 = vunpack.c.h.b16 %v1829
    %v2205 = vunpack.c.l.b16 %v1830
    %v2206 = vunpack.c.h.b16 %v1830
    %v2207 = vunpack.c.l.b16 %v1831
    %v2208 = vunpack.c.h.b16 %v1831
    %v2209 = vunpack.c.l.b16 %v1832
    %v2210 = vunpack.c.h.b16 %v1832
    %v2211 = vunpack.c.l.b16 %v1833
    %v2212 = vunpack.c.h.b16 %v1833
    %v2213 = vunpack.c.l.b16 %v1834
    %v2214 = vunpack.c.h.b16 %v1834
    %v2215 = vunpack.c.l.b16 %v1835
    %v2216 = vunpack.c.h.b16 %v1835
    %v2217 = vunpack.c.l.b16 %v1836
    %v2218 = vunpack.c.h.b16 %v1836
    %v2219 = vunpack.c.l.b16 %v1837
    %v2220 = vunpack.c.h.b16 %v1837
    %v2221 = vunpack.c.l.b16 %v1838
    %v2222 = vunpack.c.h.b16 %v1838
    %v2223 = vunpack.c.l.b16 %v1839
    %v2224 = vunpack.c.h.b16 %v1839
    %v2225 = vunpack.c.l.b16 %v1840
    %v2226 = vunpack.c.h.b16 %v1840
    %v2227 = vunpack.c.l.b16 %v1841
    %v2228 = vunpack.c.h.b16 %v1841
    %v2229 = vunpack.c.l.b16 %v1842
    %v2230 = vunpack.c.h.b16 %v1842
    %v2231 = vunpack.c.l.b16 %v1843
    %v2232 = vunpack.c.h.b16 %v1843
    %v2233 = vunpack.c.l.b16 %v1844
    %v2234 = vunpack.c.h.b16 %v1844
    %v2235 = vunpack.c.l.b16 %v1845
    %v2236 = vunpack.c.h.b16 %v1845
    %v2237 = vunpack.c.l.b16 %v1846
    %v2238 = vunpack.c.h.b16 %v1846
    %v2239 = vunpack.c.l.b16 %v1847
    %v2240 = vunpack.c.h.b16 %v1847
    %v2241 = vunpack.c.l.b16 %v1848
    %v2242 = vunpack.c.h.b16 %v1848
    %v2243 = vunpack.c.l.b16 %v1849
    %v2244 = vunpack.c.h.b16 %v1849
    %v2245 = vunpack.c.l.b16 %v1850
    %v2246 = vunpack.c.h.b16 %v1850
    %v2247 = vunpack.c.l.b16 %v1851
    %v2248 = vunpack.c.h.b16 %v1851
    %v2249 = vunpack.c.l.b16 %v1852
    %v2250 = vunpack.c.h.b16 %v1852
    %v2251 = vunpack.c.l.b16 %v1853
    %v2252 = vunpack.c.h.b16 %v1853
    %v2253 = vunpack.c.l.b16 %v1854
    %v2254 = vunpack.c.h.b16 %v1854
    %v2255 = vunpack.c.l.b16 %v1855
    %v2256 = vunpack.c.h.b16 %v1855
    %v2257 = vunpack.c.l.b16 %v1856
    %v2258 = vunpack.c.h.b16 %v1856
    %v2259 = vunpack.c.l.b16 %v1857
    %v2260 = vunpack.c.h.b16 %v1857
    %v2261 = vunpack.c.l.b16 %v1858
    %v2262 = vunpack.c.h.b16 %v1858
    %v2263 = vunpack.c.l.b16 %v1859
    %v2264 = vunpack.c.h.b16 %v1859
    %v2265 = vunpack.c.l.b16 %v1860
    %v2266 = vunpack.c.h.b16 %v1860
    %v2267 = vpack.c.b16 %v2015, %v2011
    %v2268 = vpack.c.b16 %v2016, %v2012
    %v2269 = vpack.c.b16 %v2017, %v2013
    %v2270 = vpack.c.b16 %v2018, %v2014
    %v2271 = vpack.c.b16 %v2023, %v2019
    %v2272 = vpack.c.b16 %v2024, %v2020
    %v2273 = vpack.c.b16 %v2025, %v2021
    %v2274 = vpack.c.b16 %v2026, %v2022
    %v2275 = vpack.c.b16 %v2031, %v2027
    %v2276 = vpack.c.b16 %v2032, %v2028
    %v2277 = vpack.c.b16 %v2033, %v2029
    %v2278 = vpack.c.b16 %v2034, %v2030
    %v2279 = vpack.c.b16 %v2039, %v2035
    %v2280 = vpack.c.b16 %v2040, %v2036
    %v2281 = vpack.c.b16 %v2041, %v2037
    %v2282 = vpack.c.b16 %v2042, %v2038
    %v2283 = vpack.c.b16 %v2047, %v2043
    %v2284 = vpack.c.b16 %v2048, %v2044
    %v2285 = vpack.c.b16 %v2049, %v2045
    %v2286 = vpack.c.b16 %v2050, %v2046
    %v2287 = vpack.c.b16 %v2055, %v2051
    %v2288 = vpack.c.b16 %v2056, %v2052
    %v2289 = vpack.c.b16 %v2057, %v2053
    %v2290 = vpack.c.b16 %v2058, %v2054
    %v2291 = vpack.c.b16 %v2063, %v2059
    %v2292 = vpack.c.b16 %v2064, %v2060
    %v2293 = vpack.c.b16 %v2065, %v2061
    %v2294 = vpack.c.b16 %v2066, %v2062
    %v2295 = vpack.c.b16 %v2071, %v2067
    %v2296 = vpack.c.b16 %v2072, %v2068
    %v2297 = vpack.c.b16 %v2073, %v2069
    %v2298 = vpack.c.b16 %v2074, %v2070
    %v2299 = vpack.c.b16 %v2079, %v2075
    %v2300 = vpack.c.b16 %v2080, %v2076
    %v2301 = vpack.c.b16 %v2081, %v2077
    %v2302 = vpack.c.b16 %v2082, %v2078
    %v2303 = vpack.c.b16 %v2087, %v2083
    %v2304 = vpack.c.b16 %v2088, %v2084
    %v2305 = vpack.c.b16 %v2089, %v2085
    %v2306 = vpack.c.b16 %v2090, %v2086
    %v2307 = vpack.c.b16 %v2095, %v2091
    %v2308 = vpack.c.b16 %v2096, %v2092
    %v2309 = vpack.c.b16 %v2097, %v2093
    %v2310 = vpack.c.b16 %v2098, %v2094
    %v2311 = vpack.c.b16 %v2103, %v2099
    %v2312 = vpack.c.b16 %v2104, %v2100
    %v2313 = vpack.c.b16 %v2105, %v2101
    %v2314 = vpack.c.b16 %v2106, %v2102
    %v2315 = vpack.c.b16 %v2111, %v2107
    %v2316 = vpack.c.b16 %v2112, %v2108
    %v2317 = vpack.c.b16 %v2113, %v2109
    %v2318 = vpack.c.b16 %v2114, %v2110
    %v2319 = vpack.c.b16 %v2119, %v2115
    %v2320 = vpack.c.b16 %v2120, %v2116
    %v2321 = vpack.c.b16 %v2121, %v2117
    %v2322 = vpack.c.b16 %v2122, %v2118
    %v2323 = vpack.c.b16 %v2127, %v2123
    %v2324 = vpack.c.b16 %v2128, %v2124
    %v2325 = vpack.c.b16 %v2129, %v2125
    %v2326 = vpack.c.b16 %v2130, %v2126
    %v2327 = vpack.c.b16 %v2135, %v2131
    %v2328 = vpack.c.b16 %v2136, %v2132
    %v2329 = vpack.c.b16 %v2137, %v2133
    %v2330 = vpack.c.b16 %v2138, %v2134
    %v2331 = vpack.c.b16 %v2143, %v2139
    %v2332 = vpack.c.b16 %v2144, %v2140
    %v2333 = vpack.c.b16 %v2145, %v2141
    %v2334 = vpack.c.b16 %v2146, %v2142
    %v2335 = vpack.c.b16 %v2151, %v2147
    %v2336 = vpack.c.b16 %v2152, %v2148
    %v2337 = vpack.c.b16 %v2153, %v2149
    %v2338 = vpack.c.b16 %v2154, %v2150
    %v2339 = vpack.c.b16 %v2159, %v2155
    %v2340 = vpack.c.b16 %v2160, %v2156
    %v2341 = vpack.c.b16 %v2161, %v2157
    %v2342 = vpack.c.b16 %v2162, %v2158
    %v2343 = vpack.c.b16 %v2167, %v2163
    %v2344 = vpack.c.b16 %v2168, %v2164
    %v2345 = vpack.c.b16 %v2169, %v2165
    %v2346 = vpack.c.b16 %v2170, %v2166
    %v2347 = vpack.c.b16 %v2175, %v2171
    %v2348 = vpack.c.b16 %v2176, %v2172
    %v2349 = vpack.c.b16 %v2177, %v2173
    %v2350 = vpack.c.b16 %v2178, %v2174
    %v2351 = vpack.c.b16 %v2183, %v2179
    %v2352 = vpack.c.b16 %v2184, %v2180
    %v2353 = vpack.c.b16 %v2185, %v2181
    %v2354 = vpack.c.b16 %v2186, %v2182
    %v2355 = vpack.c.b16 %v2191, %v2187
    %v2356 = vpack.c.b16 %v2192, %v2188
    %v2357 = vpack.c.b16 %v2193, %v2189
    %v2358 = vpack.c.b16 %v2194, %v2190
    %v2359 = vpack.c.b16 %v2199, %v2195
    %v2360 = vpack.c.b16 %v2200, %v2196
    %v2361 = vpack.c.b16 %v2201, %v2197
    %v2362 = vpack.c.b16 %v2202, %v2198
    %v2363 = vpack.c.b16 %v2207, %v2203
    %v2364 = vpack.c.b16 %v2208, %v2204
    %v2365 = vpack.c.b16 %v2209, %v2205
    %v2366 = vpack.c.b16 %v2210, %v2206
    %v2367 = vpack.c.b16 %v2215, %v2211
    %v2368 = vpack.c.b16 %v2216, %v2212
    %v2369 = vpack.c.b16 %v2217, %v2213
    %v2370 = vpack.c.b16 %v2218, %v2214
    %v2371 = vpack.c.b16 %v2223, %v2219
    %v2372 = vpack.c.b16 %v2224, %v2220
    %v2373 = vpack.c.b16 %v2225, %v2221
    %v2374 = vpack.c.b16 %v2226, %v2222
    %v2375 = vpack.c.b16 %v2231, %v2227
    %v2376 = vpack.c.b16 %v2232, %v2228
    %v2377 = vpack.c.b16 %v2233, %v2229
    %v2378 = vpack.c.b16 %v2234, %v2230
    %v2379 = vpack.c.b16 %v2239, %v2235
    %v2380 = vpack.c.b16 %v2240, %v2236
    %v2381 = vpack.c.b16 %v2241, %v2237
    %v2382 = vpack.c.b16 %v2242, %v2238
    %v2383 = vpack.c.b16 %v2247, %v2243
    %v2384 = vpack.c.b16 %v2248, %v2244
    %v2385 = vpack.c.b16 %v2249, %v2245
    %v2386 = vpack.c.b16 %v2250, %v2246
    %v2387 = vpack.c.b16 %v2255, %v2251
    %v2388 = vpack.c.b16 %v2256, %v2252
    %v2389 = vpack.c.b16 %v2257, %v2253
    %v2390 = vpack.c.b16 %v2258, %v2254
    %v2391 = vpack.c.b16 %v2263, %v2259
    %v2392 = vpack.c.b16 %v2264, %v2260
    %v2393 = vpack.c.b16 %v2265, %v2261
    %v2394 = vpack.c.b16 %v2266, %v2262
    %2523 = vmatprep.subr.bf16.mxu0 %v2296
    %2524 = vmatpush1.bf16.msra.mxu0 %v2295
    %2525 = vmatprep.subr.bf16.mxu0 %v2292
    %2526 = vmatpush1.bf16.msra.mxu0 %v2291
    %2527 = vmatprep.subr.bf16.mxu0 %v2288
    %2528 = vmatpush1.bf16.msra.mxu0 %v2287
    %2529 = vmatprep.subr.bf16.mxu0 %v2284
    %2530 = vmatpush1.bf16.msra.mxu0 %v2283
    %2531 = vmatprep.subr.bf16.mxu0 %v2280
    %2532 = vmatpush1.bf16.msra.mxu0 %v2279
    %2533 = vmatprep.subr.bf16.mxu0 %v2276
    %2534 = vmatpush1.bf16.msra.mxu0 %v2275
    %2535 = vmatprep.subr.bf16.mxu0 %v2272
    %2536 = vmatpush1.bf16.msra.mxu0 %v2271
    %2537 = vmatprep.subr.bf16.mxu0 %v2268
    %2538 = vmatpush1.bf16.msra.mxu0 %v2267
    %2539 = vmatprep.subr.bf16.mxu0 %v2328
    %2540 = vmatpush2.bf16.msra.mxu0 %v2327
    %2541 = vmatprep.subr.bf16.mxu0 %v2324
    %2542 = vmatpush2.bf16.msra.mxu0 %v2323
    %2543 = vmatprep.subr.bf16.mxu0 %v2320
    %2544 = vmatpush2.bf16.msra.mxu0 %v2319
    %2545 = vmatprep.subr.bf16.mxu0 %v2316
    %2546 = vmatpush2.bf16.msra.mxu0 %v2315
    %2547 = vmatprep.subr.bf16.mxu0 %v2312
    %2548 = vmatpush2.bf16.msra.mxu0 %v2311
    %2549 = vmatprep.subr.bf16.mxu0 %v2308
    %2550 = vmatpush2.bf16.msra.mxu0 %v2307
    %2551 = vmatprep.subr.bf16.mxu0 %v2304
    %2552 = vmatpush2.bf16.msra.mxu0 %v2303
    %2553 = vmatprep.subr.bf16.mxu0 %v2300
    %2554 = vmatpush2.bf16.msra.mxu0 %v2299
    %2555 = vmatprep.mubr.bf16.mxu0 %v1730
    %2556 = vmatmul.mubr.bf16.gmra.mxu0 %v1729
    %v2557 = vpop.f32.mrf.mxu0
    %v2558 = vadd.f32 %v1866, %v2557
    %v2559 = vpop.f32.mrf.mxu0
    %v2560 = vadd.f32 %v1870, %v2559
    %v2561 = vpop.f32.mrf.mxu0
    %v2562 = vpop.f32.mrf.mxu0
    %2563 = vdwg.mxu0
    %2564 = vmatprep.subr.bf16.mxu0 %v2360
    %2565 = vmatpush1.bf16.msra.mxu0 %v2359
    %2566 = vmatprep.subr.bf16.mxu0 %v2356
    %2567 = vmatpush1.bf16.msra.mxu0 %v2355
    %2568 = vmatprep.subr.bf16.mxu0 %v2352
    %2569 = vmatpush1.bf16.msra.mxu0 %v2351
    %2570 = vmatprep.subr.bf16.mxu0 %v2348
    %2571 = vmatpush1.bf16.msra.mxu0 %v2347
    %2572 = vmatprep.subr.bf16.mxu0 %v2344
    %2573 = vmatpush1.bf16.msra.mxu0 %v2343
    %2574 = vmatprep.subr.bf16.mxu0 %v2340
    %2575 = vmatpush1.bf16.msra.mxu0 %v2339
    %2576 = vmatprep.subr.bf16.mxu0 %v2336
    %2577 = vmatpush1.bf16.msra.mxu0 %v2335
    %2578 = vmatprep.subr.bf16.mxu0 %v2332
    %2579 = vmatpush1.bf16.msra.mxu0 %v2331
    %2580 = vmatprep.subr.bf16.mxu0 %v2392
    %2581 = vmatpush2.bf16.msra.mxu0 %v2391
    %2582 = vmatprep.subr.bf16.mxu0 %v2388
    %2583 = vmatpush2.bf16.msra.mxu0 %v2387
    %2584 = vmatprep.subr.bf16.mxu0 %v2384
    %2585 = vmatpush2.bf16.msra.mxu0 %v2383
    %2586 = vmatprep.subr.bf16.mxu0 %v2380
    %2587 = vmatpush2.bf16.msra.mxu0 %v2379
    %2588 = vmatprep.subr.bf16.mxu0 %v2376
    %2589 = vmatpush2.bf16.msra.mxu0 %v2375
    %2590 = vmatprep.subr.bf16.mxu0 %v2372
    %2591 = vmatpush2.bf16.msra.mxu0 %v2371
    %2592 = vmatprep.subr.bf16.mxu0 %v2368
    %2593 = vmatpush2.bf16.msra.mxu0 %v2367
    %2594 = vmatprep.subr.bf16.mxu0 %v2364
    %2595 = vmatpush2.bf16.msra.mxu0 %v2363
    %2596 = vmatprep.mubr.bf16.mxu0 %v1732
    %2597 = vmatmul.mubr.bf16.gmra.mxu0 %v1731
    %v2598 = vpop.f32.mrf.mxu0
    %v2599 = vadd.f32 %v2558, %v2598
    %v2600 = vpop.f32.mrf.mxu0
    %v2601 = vadd.f32 %v2560, %v2600
    %v2602 = vpop.f32.mrf.mxu0
    %v2603 = vpop.f32.mrf.mxu0
    %2604 = vdwg.mxu0
    %2605 = vmatprep.subr.bf16.mxu0 %v2298
    %2606 = vmatpush1.bf16.msra.mxu0 %v2297
    %2607 = vmatprep.subr.bf16.mxu0 %v2294
    %2608 = vmatpush1.bf16.msra.mxu0 %v2293
    %2609 = vmatprep.subr.bf16.mxu0 %v2290
    %2610 = vmatpush1.bf16.msra.mxu0 %v2289
    %2611 = vmatprep.subr.bf16.mxu0 %v2286
    %2612 = vmatpush1.bf16.msra.mxu0 %v2285
    %2613 = vmatprep.subr.bf16.mxu0 %v2282
    %2614 = vmatpush1.bf16.msra.mxu0 %v2281
    %2615 = vmatprep.subr.bf16.mxu0 %v2278
    %2616 = vmatpush1.bf16.msra.mxu0 %v2277
    %2617 = vmatprep.subr.bf16.mxu0 %v2274
    %2618 = vmatpush1.bf16.msra.mxu0 %v2273
    %2619 = vmatprep.subr.bf16.mxu0 %v2270
    %2620 = vmatpush1.bf16.msra.mxu0 %v2269
    %2621 = vmatprep.subr.bf16.mxu0 %v2330
    %2622 = vmatpush2.bf16.msra.mxu0 %v2329
    %2623 = vmatprep.subr.bf16.mxu0 %v2326
    %2624 = vmatpush2.bf16.msra.mxu0 %v2325
    %2625 = vmatprep.subr.bf16.mxu0 %v2322
    %2626 = vmatpush2.bf16.msra.mxu0 %v2321
    %2627 = vmatprep.subr.bf16.mxu0 %v2318
    %2628 = vmatpush2.bf16.msra.mxu0 %v2317
    %2629 = vmatprep.subr.bf16.mxu0 %v2314
    %2630 = vmatpush2.bf16.msra.mxu0 %v2313
    %2631 = vmatprep.subr.bf16.mxu0 %v2310
    %2632 = vmatpush2.bf16.msra.mxu0 %v2309
    %2633 = vmatprep.subr.bf16.mxu0 %v2306
    %2634 = vmatpush2.bf16.msra.mxu0 %v2305
    %2635 = vmatprep.subr.bf16.mxu0 %v2302
    %2636 = vmatpush2.bf16.msra.mxu0 %v2301
    %2637 = vmatprep.mubr.bf16.mxu0 %v1730
    %2638 = vmatmul.mubr.bf16.gmra.mxu0 %v1729
    %v2639 = vpop.f32.mrf.mxu0
    %v2640 = vadd.f32 %v1874, %v2639
    %v2641 = vpop.f32.mrf.mxu0
    %v2642 = vadd.f32 %v1878, %v2641
    %v2643 = vpop.f32.mrf.mxu0
    %v2644 = vpop.f32.mrf.mxu0
    %2645 = vdwg.mxu0
    %2646 = vmatprep.subr.bf16.mxu0 %v2362
    %2647 = vmatpush1.bf16.msra.mxu0 %v2361
    %2648 = vmatprep.subr.bf16.mxu0 %v2358
    %2649 = vmatpush1.bf16.msra.mxu0 %v2357
    %2650 = vmatprep.subr.bf16.mxu0 %v2354
    %2651 = vmatpush1.bf16.msra.mxu0 %v2353
    %2652 = vmatprep.subr.bf16.mxu0 %v2350
    %2653 = vmatpush1.bf16.msra.mxu0 %v2349
    %2654 = vmatprep.subr.bf16.mxu0 %v2346
    %2655 = vmatpush1.bf16.msra.mxu0 %v2345
    %2656 = vmatprep.subr.bf16.mxu0 %v2342
    %2657 = vmatpush1.bf16.msra.mxu0 %v2341
    %2658 = vmatprep.subr.bf16.mxu0 %v2338
    %2659 = vmatpush1.bf16.msra.mxu0 %v2337
    %2660 = vmatprep.subr.bf16.mxu0 %v2334
    %2661 = vmatpush1.bf16.msra.mxu0 %v2333
    %2662 = vmatprep.subr.bf16.mxu0 %v2394
    %2663 = vmatpush2.bf16.msra.mxu0 %v2393
    %2664 = vmatprep.subr.bf16.mxu0 %v2390
    %2665 = vmatpush2.bf16.msra.mxu0 %v2389
    %2666 = vmatprep.subr.bf16.mxu0 %v2386
    %2667 = vmatpush2.bf16.msra.mxu0 %v2385
    %2668 = vmatprep.subr.bf16.mxu0 %v2382
    %2669 = vmatpush2.bf16.msra.mxu0 %v2381
    %2670 = vmatprep.subr.bf16.mxu0 %v2378
    %2671 = vmatpush2.bf16.msra.mxu0 %v2377
    %2672 = vmatprep.subr.bf16.mxu0 %v2374
    %2673 = vmatpush2.bf16.msra.mxu0 %v2373
    %2674 = vmatprep.subr.bf16.mxu0 %v2370
    %2675 = vmatpush2.bf16.msra.mxu0 %v2369
    %2676 = vmatprep.subr.bf16.mxu0 %v2366
    %2677 = vmatpush2.bf16.msra.mxu0 %v2365
    %2678 = vmatprep.mubr.bf16.mxu0 %v1732
    %2679 = vmatmul.mubr.bf16.gmra.mxu0 %v1731
    %v2680 = vpop.f32.mrf.mxu0
    %v2681 = vadd.f32 %v2640, %v2680
    %v2682 = vpop.f32.mrf.mxu0
    %v2683 = vadd.f32 %v2642, %v2682
    %v2684 = vpop.f32.mrf.mxu0
    %v2685 = vpop.f32.mrf.mxu0
    %2686 = vdwg.mxu0
    %v2687 = vmax.f32 %v2599, 0.0
    %v2688 = vmax.f32 %v2601, 0.0
    %v2689 = vmax.f32 %v2681, 0.0
    %v2690 = vmax.f32 %v2683, 0.0
    %v2691 = vpack.c.bf16 %v2687, %v2687
    %v2692 = vpack.c.bf16 %v2688, %v2688
    %v2693 = vpack.c.bf16 %v2689, %v2689
    %v2694 = vpack.c.bf16 %v2690, %v2690
    %v2695 = vld [vmem:[#allocation10] sm:$0xf]
    %v2696 = vld [vmem:[#allocation10 + $0x4] sm:$0xf]
    %v2697 = vld [vmem:[#allocation10 + $0x8] sm:$0xf]
    %v2698 = vld [vmem:[#allocation10 + $0xc] sm:$0xf]
    %v2699 = vld [vmem:[#allocation10 + $0x10] sm:$0xf]
    %v2700 = vld [vmem:[#allocation10 + $0x14] sm:$0xf]
    %v2701 = vld [vmem:[#allocation10 + $0x18] sm:$0xf]
    %v2702 = vld [vmem:[#allocation10 + $0x1c] sm:$0xf]
    %v2703 = vld [vmem:[#allocation10 + $0x20] sm:$0xf]
    %v2704 = vld [vmem:[#allocation10 + $0x24] sm:$0xf]
    %v2705 = vld [vmem:[#allocation10 + $0x28] sm:$0xf]
    %v2706 = vld [vmem:[#allocation10 + $0x2c] sm:$0xf]
    %v2707 = vld [vmem:[#allocation10 + $0x30] sm:$0xf]
    %v2708 = vld [vmem:[#allocation10 + $0x34] sm:$0xf]
    %v2709 = vld [vmem:[#allocation10 + $0x38] sm:$0xf]
    %v2710 = vld [vmem:[#allocation10 + $0x3c] sm:$0xf]
    %v2711 = vld [vmem:[#allocation10 + $0x40] sm:$0xf]
    %v2712 = vld [vmem:[#allocation10 + $0x44] sm:$0xf]
    %v2713 = vld [vmem:[#allocation10 + $0x48] sm:$0xf]
    %v2714 = vld [vmem:[#allocation10 + $0x4c] sm:$0xf]
    %v2715 = vld [vmem:[#allocation10 + $0x50] sm:$0xf]
    %v2716 = vld [vmem:[#allocation10 + $0x54] sm:$0xf]
    %v2717 = vld [vmem:[#allocation10 + $0x58] sm:$0xf]
    %v2718 = vld [vmem:[#allocation10 + $0x5c] sm:$0xf]
    %v2719 = vld [vmem:[#allocation10 + $0x60] sm:$0xf]
    %v2720 = vld [vmem:[#allocation10 + $0x64] sm:$0xf]
    %v2721 = vld [vmem:[#allocation10 + $0x68] sm:$0xf]
    %v2722 = vld [vmem:[#allocation10 + $0x6c] sm:$0xf]
    %v2723 = vld [vmem:[#allocation10 + $0x70] sm:$0xf]
    %v2724 = vld [vmem:[#allocation10 + $0x74] sm:$0xf]
    %v2725 = vld [vmem:[#allocation10 + $0x78] sm:$0xf]
    %v2726 = vld [vmem:[#allocation10 + $0x7c] sm:$0xf]
    %v2727 = vld [vmem:[#allocation10 + $0x80] sm:$0xf]
    %v2728 = vld [vmem:[#allocation10 + $0x84] sm:$0xf]
    %v2729 = vld [vmem:[#allocation10 + $0x88] sm:$0xf]
    %v2730 = vld [vmem:[#allocation10 + $0x8c] sm:$0xf]
    %v2731 = vld [vmem:[#allocation10 + $0x90] sm:$0xf]
    %v2732 = vld [vmem:[#allocation10 + $0x94] sm:$0xf]
    %v2733 = vld [vmem:[#allocation10 + $0x98] sm:$0xf]
    %v2734 = vld [vmem:[#allocation10 + $0x9c] sm:$0xf]
    %v2735 = vld [vmem:[#allocation10 + $0xa0] sm:$0xf]
    %v2736 = vld [vmem:[#allocation10 + $0xa4] sm:$0xf]
    %v2737 = vld [vmem:[#allocation10 + $0xa8] sm:$0xf]
    %v2738 = vld [vmem:[#allocation10 + $0xac] sm:$0xf]
    %v2739 = vld [vmem:[#allocation10 + $0xb0] sm:$0xf]
    %v2740 = vld [vmem:[#allocation10 + $0xb4] sm:$0xf]
    %v2741 = vld [vmem:[#allocation10 + $0xb8] sm:$0xf]
    %v2742 = vld [vmem:[#allocation10 + $0xbc] sm:$0xf]
    %v2743 = vld [vmem:[#allocation10 + $0xc0] sm:$0xf]
    %v2744 = vld [vmem:[#allocation10 + $0xc4] sm:$0xf]
    %v2745 = vld [vmem:[#allocation10 + $0xc8] sm:$0xf]
    %v2746 = vld [vmem:[#allocation10 + $0xcc] sm:$0xf]
    %v2747 = vld [vmem:[#allocation10 + $0xd0] sm:$0xf]
    %v2748 = vld [vmem:[#allocation10 + $0xd4] sm:$0xf]
    %v2749 = vld [vmem:[#allocation10 + $0xd8] sm:$0xf]
    %v2750 = vld [vmem:[#allocation10 + $0xdc] sm:$0xf]
    %v2751 = vld [vmem:[#allocation10 + $0xe0] sm:$0xf]
    %v2752 = vld [vmem:[#allocation10 + $0xe4] sm:$0xf]
    %v2753 = vld [vmem:[#allocation10 + $0xe8] sm:$0xf]
    %v2754 = vld [vmem:[#allocation10 + $0xec] sm:$0xf]
    %v2755 = vld [vmem:[#allocation10 + $0xf0] sm:$0xf]
    %v2756 = vld [vmem:[#allocation10 + $0xf4] sm:$0xf]
    %v2757 = vld [vmem:[#allocation10 + $0xf8] sm:$0xf]
    %v2758 = vld [vmem:[#allocation10 + $0xfc] sm:$0xf]
    %v2759 = vld [vmem:[%s6] sm:$0x1]
    %v2761 = vlaneseq
    %v2762 = vshrl.u32 %v2761, 7
    %v2763 = vsub.s32 0, %v2762
    %v2764 = vrot.slane %v2759, %v2763
    %v2830 = vunpack.c.l.b16 %v2695
    %v2831 = vunpack.c.l.b16 %v2696
    %v2832 = vunpack.c.l.b16 %v2697
    %v2833 = vunpack.c.l.b16 %v2698
    %v2834 = vunpack.c.l.b16 %v2699
    %v2835 = vunpack.c.l.b16 %v2700
    %v2836 = vunpack.c.l.b16 %v2701
    %v2837 = vunpack.c.l.b16 %v2702
    %v2838 = vunpack.c.l.b16 %v2703
    %v2839 = vunpack.c.l.b16 %v2704
    %v2840 = vunpack.c.l.b16 %v2705
    %v2841 = vunpack.c.l.b16 %v2706
    %v2842 = vunpack.c.l.b16 %v2707
    %v2843 = vunpack.c.l.b16 %v2708
    %v2844 = vunpack.c.l.b16 %v2709
    %v2845 = vunpack.c.l.b16 %v2710
    %v2846 = vunpack.c.l.b16 %v2711
    %v2847 = vunpack.c.l.b16 %v2712
    %v2848 = vunpack.c.l.b16 %v2713
    %v2849 = vunpack.c.l.b16 %v2714
    %v2850 = vunpack.c.l.b16 %v2715
    %v2851 = vunpack.c.l.b16 %v2716
    %v2852 = vunpack.c.l.b16 %v2717
    %v2853 = vunpack.c.l.b16 %v2718
    %v2854 = vunpack.c.l.b16 %v2719
    %v2855 = vunpack.c.l.b16 %v2720
    %v2856 = vunpack.c.l.b16 %v2721
    %v2857 = vunpack.c.l.b16 %v2722
    %v2858 = vunpack.c.l.b16 %v2723
    %v2859 = vunpack.c.l.b16 %v2724
    %v2860 = vunpack.c.l.b16 %v2725
    %v2861 = vunpack.c.l.b16 %v2726
    %v2862 = vunpack.c.l.b16 %v2727
    %v2863 = vunpack.c.l.b16 %v2728
    %v2864 = vunpack.c.l.b16 %v2729
    %v2865 = vunpack.c.l.b16 %v2730
    %v2866 = vunpack.c.l.b16 %v2731
    %v2867 = vunpack.c.l.b16 %v2732
    %v2868 = vunpack.c.l.b16 %v2733
    %v2869 = vunpack.c.l.b16 %v2734
    %v2870 = vunpack.c.l.b16 %v2735
    %v2871 = vunpack.c.l.b16 %v2736
    %v2872 = vunpack.c.l.b16 %v2737
    %v2873 = vunpack.c.l.b16 %v2738
    %v2874 = vunpack.c.l.b16 %v2739
    %v2875 = vunpack.c.l.b16 %v2740
    %v2876 = vunpack.c.l.b16 %v2741
    %v2877 = vunpack.c.l.b16 %v2742
    %v2878 = vunpack.c.l.b16 %v2743
    %v2879 = vunpack.c.l.b16 %v2744
    %v2880 = vunpack.c.l.b16 %v2745
    %v2881 = vunpack.c.l.b16 %v2746
    %v2882 = vunpack.c.l.b16 %v2747
    %v2883 = vunpack.c.l.b16 %v2748
    %v2884 = vunpack.c.l.b16 %v2749
    %v2885 = vunpack.c.l.b16 %v2750
    %v2886 = vunpack.c.l.b16 %v2751
    %v2887 = vunpack.c.l.b16 %v2752
    %v2888 = vunpack.c.l.b16 %v2753
    %v2889 = vunpack.c.l.b16 %v2754
    %v2890 = vunpack.c.l.b16 %v2755
    %v2891 = vunpack.c.l.b16 %v2756
    %v2892 = vunpack.c.l.b16 %v2757
    %v2893 = vunpack.c.l.b16 %v2758
    %v2894 = vpack.c.b16 %v2831, %v2830
    %v2895 = vpack.c.b16 %v2833, %v2832
    %v2896 = vpack.c.b16 %v2835, %v2834
    %v2897 = vpack.c.b16 %v2837, %v2836
    %v2898 = vpack.c.b16 %v2839, %v2838
    %v2899 = vpack.c.b16 %v2841, %v2840
    %v2900 = vpack.c.b16 %v2843, %v2842
    %v2901 = vpack.c.b16 %v2845, %v2844
    %v2902 = vpack.c.b16 %v2847, %v2846
    %v2903 = vpack.c.b16 %v2849, %v2848
    %v2904 = vpack.c.b16 %v2851, %v2850
    %v2905 = vpack.c.b16 %v2853, %v2852
    %v2906 = vpack.c.b16 %v2855, %v2854
    %v2907 = vpack.c.b16 %v2857, %v2856
    %v2908 = vpack.c.b16 %v2859, %v2858
    %v2909 = vpack.c.b16 %v2861, %v2860
    %v2910 = vpack.c.b16 %v2863, %v2862
    %v2911 = vpack.c.b16 %v2865, %v2864
    %v2912 = vpack.c.b16 %v2867, %v2866
    %v2913 = vpack.c.b16 %v2869, %v2868
    %v2914 = vpack.c.b16 %v2871, %v2870
    %v2915 = vpack.c.b16 %v2873, %v2872
    %v2916 = vpack.c.b16 %v2875, %v2874
    %v2917 = vpack.c.b16 %v2877, %v2876
    %v2918 = vpack.c.b16 %v2879, %v2878
    %v2919 = vpack.c.b16 %v2881, %v2880
    %v2920 = vpack.c.b16 %v2883, %v2882
    %v2921 = vpack.c.b16 %v2885, %v2884
    %v2922 = vpack.c.b16 %v2887, %v2886
    %v2923 = vpack.c.b16 %v2889, %v2888
    %v2924 = vpack.c.b16 %v2891, %v2890
    %v2925 = vpack.c.b16 %v2893, %v2892
    %2958 = vmatprep.subr.bf16.mxu0 0
    %2959 = vmatpush1.bf16.msra.mxu0 %v2901
    %2960 = vmatprep.subr.bf16.mxu0 0
    %2961 = vmatpush1.bf16.msra.mxu0 %v2900
    %2962 = vmatprep.subr.bf16.mxu0 0
    %2963 = vmatpush1.bf16.msra.mxu0 %v2899
    %2964 = vmatprep.subr.bf16.mxu0 0
    %2965 = vmatpush1.bf16.msra.mxu0 %v2898
    %2966 = vmatprep.subr.bf16.mxu0 0
    %2967 = vmatpush1.bf16.msra.mxu0 %v2897
    %2968 = vmatprep.subr.bf16.mxu0 0
    %2969 = vmatpush1.bf16.msra.mxu0 %v2896
    %2970 = vmatprep.subr.bf16.mxu0 0
    %2971 = vmatpush1.bf16.msra.mxu0 %v2895
    %2972 = vmatprep.subr.bf16.mxu0 0
    %2973 = vmatpush1.bf16.msra.mxu0 %v2894
    %2974 = vmatprep.subr.bf16.mxu0 0
    %2975 = vmatpush2.bf16.msra.mxu0 %v2909
    %2976 = vmatprep.subr.bf16.mxu0 0
    %2977 = vmatpush2.bf16.msra.mxu0 %v2908
    %2978 = vmatprep.subr.bf16.mxu0 0
    %2979 = vmatpush2.bf16.msra.mxu0 %v2907
    %2980 = vmatprep.subr.bf16.mxu0 0
    %2981 = vmatpush2.bf16.msra.mxu0 %v2906
    %2982 = vmatprep.subr.bf16.mxu0 0
    %2983 = vmatpush2.bf16.msra.mxu0 %v2905
    %2984 = vmatprep.subr.bf16.mxu0 0
    %2985 = vmatpush2.bf16.msra.mxu0 %v2904
    %2986 = vmatprep.subr.bf16.mxu0 0
    %2987 = vmatpush2.bf16.msra.mxu0 %v2903
    %2988 = vmatprep.subr.bf16.mxu0 0
    %2989 = vmatpush2.bf16.msra.mxu0 %v2902
    %2990 = vmatprep.mubr.bf16.mxu0 %v2692
    %2991 = vmatmul.mubr.bf16.gmra.mxu0 %v2691
    %v2992 = vpop.f32.mrf.mxu0
    %v2993 = vadd.f32 %v2764, %v2992
    %v2994 = vpop.f32.mrf.mxu0
    %v2995 = vpop.f32.mrf.mxu0
    %v2996 = vpop.f32.mrf.mxu0
    %2997 = vdwg.mxu0
    %2998 = vmatprep.subr.bf16.mxu0 0
    %2999 = vmatpush1.bf16.msra.mxu0 %v2917
    %3000 = vmatprep.subr.bf16.mxu0 0
    %3001 = vmatpush1.bf16.msra.mxu0 %v2916
    %3002 = vmatprep.subr.bf16.mxu0 0
    %3003 = vmatpush1.bf16.msra.mxu0 %v2915
    %3004 = vmatprep.subr.bf16.mxu0 0
    %3005 = vmatpush1.bf16.msra.mxu0 %v2914
    %3006 = vmatprep.subr.bf16.mxu0 0
    %3007 = vmatpush1.bf16.msra.mxu0 %v2913
    %3008 = vmatprep.subr.bf16.mxu0 0
    %3009 = vmatpush1.bf16.msra.mxu0 %v2912
    %3010 = vmatprep.subr.bf16.mxu0 0
    %3011 = vmatpush1.bf16.msra.mxu0 %v2911
    %3012 = vmatprep.subr.bf16.mxu0 0
    %3013 = vmatpush1.bf16.msra.mxu0 %v2910
    %3014 = vmatprep.subr.bf16.mxu0 0
    %3015 = vmatpush2.bf16.msra.mxu0 %v2925
    %3016 = vmatprep.subr.bf16.mxu0 0
    %3017 = vmatpush2.bf16.msra.mxu0 %v2924
    %3018 = vmatprep.subr.bf16.mxu0 0
    %3019 = vmatpush2.bf16.msra.mxu0 %v2923
    %3020 = vmatprep.subr.bf16.mxu0 0
    %3021 = vmatpush2.bf16.msra.mxu0 %v2922
    %3022 = vmatprep.subr.bf16.mxu0 0
    %3023 = vmatpush2.bf16.msra.mxu0 %v2921
    %3024 = vmatprep.subr.bf16.mxu0 0
    %3025 = vmatpush2.bf16.msra.mxu0 %v2920
    %3026 = vmatprep.subr.bf16.mxu0 0
    %3027 = vmatpush2.bf16.msra.mxu0 %v2919
    %3028 = vmatprep.subr.bf16.mxu0 0
    %3029 = vmatpush2.bf16.msra.mxu0 %v2918
    %3030 = vmatprep.mubr.bf16.mxu0 %v2694
    %3031 = vmatmul.mubr.bf16.gmra.mxu0 %v2693
    %v3032 = vpop.f32.mrf.mxu0
    %v3033 = vadd.f32 %v2993, %v3032
    %v3034 = vpop.f32.mrf.mxu0
    %v3035 = vpop.f32.mrf.mxu0
    %v3036 = vpop.f32.mrf.mxu0
    %3037 = vdwg.mxu0
    %3038 = vst [vmem:[#allocation11] sm:$0xff] %v3033
    // Predicated region
    $region50: #{tpu_custom_call.1} parent=1 // pred_check
      _
    $region51: #{tpu_custom_call.1} parent=1 // pred_check_branch
      %3040 = sbr.rel (0) target = $region53
    $region52: #{tpu_custom_call.1} parent=1 // pred_region
      %s3042 = ssub.s32 128, 32
      %3043 = vsyncadd [#allocation4], %s3042
      %s3044 = sshll.u32 [#allocation11], 4
      %s3045 = int_to_ptr.vmem [resolvable:$true] %s3044
      %3050 = dma.vmem_to_hbm [thread:$0]  %s3045, 32, %s7, [#allocation4], 32, 32, 2
    $region53: #{tpu_custom_call.1} parent=1 // pred_fallthru
      _
    // Predicated region
    $region54: #{tpu_custom_call.1} parent=1 // pred_check
      _
    $region55: #{tpu_custom_call.1} parent=1 // pred_check_branch
      %3052 = sbr.rel (0) target = $region57
    $region56: #{tpu_custom_call.1} parent=1 // pred_region
      %3053 = dma.done [#allocation4], 128
    $region57: #{tpu_custom_call.1} parent=1 // pred_fallthru
      _
    %3054 = vsyncpa [#allocation3], 1
    %3055 = vsyncpa [#allocation6], 1
    %3056 = vsyncpa [#allocation9], 1
    %3057 = vsyncpa [#allocation4], 1

</llo_original>
